<compile_context>
chip_gen: v6e
topology: v6e:2x2x1
jax: 0.10.0
libtpu: 0.0.40
codegen_flags: <defaults>
</compile_context>

<pallas_src>
import jax
import jax.numpy as jnp
from jax import lax
from jax.experimental import pallas as pl
from jax.experimental.pallas import tpu as pltpu

D_MODEL = 64
NHEAD = 2
HEAD_DIM = D_MODEL // NHEAD
HEAD_SHIFT = HEAD_DIM.bit_length() - 1          # 5
LN_EPS = 1e-5      # torch.nn.LayerNorm default
ATTN_EPS = 1e-6    # LoFTR LinearAttention default

assert NHEAD & (NHEAD - 1) == 0 and HEAD_DIM == 1 << HEAD_SHIFT


def _layernorm(v, g, b):
    mu = jnp.mean(v, axis=-1, keepdims=True)
    var = jnp.mean((v - mu) ** 2, axis=-1, keepdims=True)
    return (v - mu) * lax.rsqrt(var + LN_EPS) * g + b


# --------------------------------------------------------------------------
# Pallas kernel: all LoFTR encoder layers, one batch tile per grid step.
# grid = (num_batch_tiles, num_layers); the output block is resident across
# the layer axis and carries the feature map from layer to layer.
# --------------------------------------------------------------------------
def _loftr_stack_kernel(x_ref, w_ref, vecs_ref, o_ref, msg_ref):
    layer = pl.program_id(1)

    # Layer 0 of each batch tile: seed the resident output block with the input.
    @pl.when(layer == 0)
    def _():
        o_ref[...] = x_ref[...]

    B, L, C = o_ref.shape
    BL = B * L
    d = D_MODEL

    # Consolidated bf16 weight slab: one DMA per layer step (prefix slices only).
    w = w_ref[0]                                  # [7d, 3d] bf16
    w_qkv = w[0:d, :]                             # [64, 192]   (q | k | v)
    w_adap = w[d:2 * d, 0:d]                      # [64, 64]
    w_merge = w[2 * d:3 * d, 0:d]                 # [64, 64]
    w_mlp1a = w[3 * d:4 * d, 0:2 * d]             # [64, 128]   (x half of MLP-1)
    w_mlp1b = w[4 * d:5 * d, 0:2 * d]             # [64, 128]   (message half)
    w_mlp2 = w[5 * d:7 * d, 0:d]                  # [128, 64]

    V = vecs_ref[0]                               # [8, 64] f32, single load
    adap_b = V[0:1, :]
    g0, b0 = V[1:2, :], V[2:3, :]                 # norm0 with modulation1 folded in
    g1, b1 = V[3:4, :], V[4:5, :]                 # norm1 with modulation2 folded in
    g2, b2 = V[5:6, :], V[6:7, :]                 # norm2

    x_in = o_ref[...].reshape(BL, C)              # current features (layer carry)

    # adapdim -> norm0 (+ folded modulation1);   x == source for self-attention.
    x = jnp.dot(x_in.astype(jnp.bfloat16), w_adap,
                preferred_element_type=jnp.float32) + adap_b
    x = _layernorm(x, g0, b0)                     # f32 [BL, 64]
    xb = x.astype(jnp.bfloat16)

    # Fused q/k/v projection (no bias): one wide matmul, then lane slices.
    qkv = jnp.dot(xb, w_qkv, preferred_element_type=jnp.float32)   # [BL, 192]
    q = qkv[:, 0:d]
    k = qkv[:, d:2 * d]
    v = qkv[:, 2 * d:3 * d]

    # LinearAttention feature map  elu(.) + 1  ==  where(x>0, x+1, exp(min(x,0)))
    qf = jnp.where(q > 0, q + 1.0, jnp.exp(jnp.minimum(q, 0.0)))
    kf = jnp.where(k > 0, k + 1.0, jnp.exp(jnp.minimum(k, 0.0)))

    # Block-diagonal head mask tiled to [64, 128] (covers the kv | ksum halves).
    row = lax.broadcasted_iota(jnp.int32, (d, 2 * d), 0)
    col = lax.broadcasted_iota(jnp.int32, (d, 2 * d), 1)
    mask2 = jnp.where((row >> HEAD_SHIFT) == ((col >> HEAD_SHIFT) & (NHEAD - 1)),
                      1.0, 0.0)

    inv_len = 1.0 / L
    qf16 = qf.astype(jnp.bfloat16)
    kf16 = kf.astype(jnp.bfloat16)
    # [v/L | 1]: the ones-columns make  kf^T @ v_aug  carry ksum in lanes 64:128,
    # so kv + ksum come out of a single 128-lane MXU pass.
    v_aug = jnp.concatenate(
        [v * inv_len, jnp.ones((BL, d), jnp.float32)], axis=1).astype(jnp.bfloat16)

    for b in range(B):                            # short static unroll over batch tile
        lo = b * L
        kv = lax.dot_general(kf16[lo:lo + L, :], v_aug[lo:lo + L, :],
                             dimension_numbers=(((0,), (0,)), ((), ())),
                             preferred_element_type=jnp.float32)      # [64, 128]
        rhs = (kv * mask2).astype(jnp.bfloat16)                       # masked kv | ksum
        nd = jnp.dot(qf16[lo:lo + L, :], rhs,
                     preferred_element_type=jnp.float32)              # [L, 128]
        num = nd[:, 0:d]
        den = nd[:, d:2 * d]
        msg_ref[lo:lo + L, :] = (num * pl.reciprocal(den + ATTN_EPS, approx=True)
                                 * float(L))

    message = msg_ref[...]                                            # [BL, 64] f32

    # merge -> norm1 (+ folded modulation2)
    message = jnp.dot(message.astype(jnp.bfloat16), w_merge,
                      preferred_element_type=jnp.float32)
    message = _layernorm(message, g1, b1)

    # mlp(cat([x, message])) without the lane concat:
    #   hid = relu(x @ W1[:64] + message @ W1[64:]);  m = hid @ W2
    hid = jnp.maximum(
        jnp.dot(xb, w_mlp1a, preferred_element_type=jnp.float32)
        + jnp.dot(message.astype(jnp.bfloat16), w_mlp1b,
                  preferred_element_type=jnp.float32),
        0.0)
    m = jnp.dot(hid.astype(jnp.bfloat16), w_mlp2,
                preferred_element_type=jnp.float32)
    m = _layernorm(m, g2, b2)

    o_ref[...] = (x + m).reshape(B, L, C).astype(o_ref.dtype)


# --------------------------------------------------------------------------
# Plain-JAX glue
# --------------------------------------------------------------------------
def _modulation_shift_scale(cond, w, b):
    # Modulation(d, d, zero_init=True, single_layer=True):
    #   emb = Linear(silu(cond)); shift, scale = chunk(emb, 2); x*(1+scale)+shift
    # TODO(synk): Modulation class not provided in the reference; with cond=None
    # (the mask the outer module actually passes) it is the identity.  Only a
    # global [d]-vector cond is supported here (it is folded per-layer into LN).
    if cond is None:
        z = jnp.zeros((D_MODEL,), jnp.float32)
        return z, z
    emb = jnp.dot(jax.nn.silu(cond), w) + b
    return emb[:D_MODEL], emb[D_MODEL:]


def local_feature_transformer(feat, params_list, mask=None, b_tile=None,
                              donate_feat=False):
    """All encoder layers fused into a single pallas_call."""
    N, L, C = feat.shape
    assert C == D_MODEL, "the feature number of src and transformer must be equal"
    d = D_MODEL
    num_layers = len(params_list)

    if b_tile is None:
        target = max(1, 1024 // max(L, 1))        # ~1k rows/step amortizes overhead
        cap = N // 2 if N >= 2 else 1             # >=2 parallel steps for v7x's 2 TCs
        limit = max(1, min(target, cap))
        b_tile = max(bt for bt in range(1, N + 1) if N % bt == 0 and bt <= limit)
    assert N % b_tile == 0

    def layer_tensors(p):
        shift1, scale1 = _modulation_shift_scale(mask, p["mod1_w"], p["mod1_b"])
        shift2, scale2 = _modulation_shift_scale(mask, p["mod2_w"], p["mod2_b"])
        # Fold the per-call-constant modulations into the LayerNorm affine:
        #   (LN(x)*g+b)*(1+s)+t == LN(x)*(g*(1+s)) + (b*(1+s)+t)
        g0 = p["norm0_g"] * (1.0 + scale1)
        b0 = p["norm0_b"] * (1.0 + scale1) + shift1
        g1 = p["norm1_g"] * (1.0 + scale2)
        b1 = p["norm1_b"] * (1.0 + scale2) + shift2
        qkv_w = jnp.concatenate([p["q_w"], p["k_w"], p["v_w"]], axis=1)   # [64, 192]
        slab = jnp.zeros((7 * d, 3 * d), jnp.float32)
        slab = slab.at[0:d, :].set(qkv_w)
        slab = slab.at[d:2 * d, 0:d].set(p["adapdim_w"])
        slab = slab.at[2 * d:3 * d, 0:d].set(p["merge_w"])
        slab = slab.at[3 * d:5 * d, 0:2 * d].set(p["mlp_w1"])
        slab = slab.at[5 * d:7 * d, 0:d].set(p["mlp_w2"])
        vecs = jnp.stack([p["adapdim_b"], g0, b0, g1, b1,
                          p["norm2_g"], p["norm2_b"],
                          jnp.zeros((d,), jnp.float32)])                  # [8, 64]
        return slab.astype(jnp.bfloat16), vecs

    per_layer = [layer_tensors(p) for p in params_list]
    w_slab = jnp.stack([t[0] for t in per_layer])     # [layers, 448, 192] bf16
    vecs = jnp.stack([t[1] for t in per_layer])       # [layers, 8, 64]  f32

    # VMEM budget, re-derived per call and clamped to a range safe on v5e/v6e/v7x.
    feat_blk = b_tile * L * d * 4
    w_blk = 7 * d * 2 * 128 * 2 + 8 * 128 * 4         # lane-padded slab + vecs
    live = feat_blk * 20                              # rough live-intermediate bound
    vmem_limit = int(min(max(2 * 2 * feat_blk + 2 * w_blk + feat_blk + live,
                             32 * 1024 * 1024), 64 * 1024 * 1024))

    return pl.pallas_call(
        _loftr_stack_kernel,
        out_shape=jax.ShapeDtypeStruct((N, L, d), jnp.float32),
        grid_spec=pltpu.PrefetchScalarGridSpec(
            num_scalar_prefetch=0,
            grid=(N // b_tile, num_layers),
            in_specs=[
                pl.BlockSpec((b_tile, L, d),    lambda b, l: (b, 0, 0)),   # feat
                pl.BlockSpec((1, 7 * d, 3 * d), lambda b, l: (l, 0, 0)),   # weight slab
                pl.BlockSpec((1, 8, d),         lambda b, l: (l, 0, 0)),   # vec table
            ],
            out_specs=pl.BlockSpec((b_tile, L, d), lambda b, l: (b, 0, 0)),
            scratch_shapes=[pltpu.VMEM((b_tile * L, d), jnp.float32)],     # message
        ),
        compiler_params=pltpu.CompilerParams(
            dimension_semantics=("parallel", "arbitrary"),
            vmem_limit_bytes=vmem_limit),
        input_output_aliases=({0: 0} if donate_feat else {}),
    )(feat, w_slab, vecs)


# --------------------------------------------------------------------------
# Deterministic parameter init (xavier-uniform for matrices, matching
# LocalFeatureTransformer._reset_parameters; LayerNorm = (ones, zeros);
# Modulation biases zero-init).
# --------------------------------------------------------------------------
def _xavier(key, shape):
    lim = (6.0 / (shape[0] + shape[1])) ** 0.5
    return jax.random.uniform(key, shape, jnp.float32, -lim, lim)


def init_layer_params(key):
    d = D_MODEL
    ks = jax.random.split(key, 12)
    inv = 1.0 / (d ** 0.5)
    return dict(
        adapdim_w=_xavier(ks[0], (d, d)),
        adapdim_b=jax.random.uniform(ks[1], (d,), jnp.float32, -inv, inv),
        q_w=_xavier(ks[2], (d, d)),
        k_w=_xavier(ks[3], (d, d)),
        v_w=_xavier(ks[4], (d, d)),
        merge_w=_xavier(ks[5], (d, d)),
        mlp_w1=_xavier(ks[6], (2 * d, 2 * d)),
        mlp_w2=_xavier(ks[7], (2 * d, d)),
        norm0_g=jnp.ones((d,), jnp.float32), norm0_b=jnp.zeros((d,), jnp.float32),
        norm1_g=jnp.ones((d,), jnp.float32), norm1_b=jnp.zeros((d,), jnp.float32),
        norm2_g=jnp.ones((d,), jnp.float32), norm2_b=jnp.zeros((d,), jnp.float32),
        mod1_w=_xavier(ks[8], (d, 2 * d)), mod1_b=jnp.zeros((2 * d,), jnp.float32),
        mod2_w=_xavier(ks[9], (d, 2 * d)), mod2_b=jnp.zeros((2 * d,), jnp.float32),
    )


# --------------------------------------------------------------------------
# Pure-JAX f32 reference (same math as the torch module) for validation.
# --------------------------------------------------------------------------
def _layer_ref(feat, p, cond=None):
    N, L, _ = feat.shape
    shift1, scale1 = _modulation_shift_scale(cond, p["mod1_w"], p["mod1_b"])
    shift2, scale2 = _modulation_shift_scale(cond, p["mod2_w"], p["mod2_b"])
    x = feat @ p["adapdim_w"] + p["adapdim_b"]
    x = _layernorm(x, p["norm0_g"], p["norm0_b"])
    x = x * (1.0 + scale1) + shift1
    q, k, v = x @ p["q_w"], x @ p["k_w"], x @ p["v_w"]
    qf = (jax.nn.elu(q) + 1.0).reshape(N, L, NHEAD, HEAD_DIM)
    kf = (jax.nn.elu(k) + 1.0).reshape(N, L, NHEAD, HEAD_DIM)
    vv = v.reshape(N, L, NHEAD, HEAD_DIM) / L
    kv = jnp.einsum("nshd,nshv->nhdv", kf, vv)
    z = 1.0 / (jnp.einsum("nlhd,nhd->nlh", qf, kf.sum(axis=1)) + ATTN_EPS)
    msg = jnp.einsum("nlhd,nhdv,nlh->nlhv", qf, kv, z) * L
    msg = msg.reshape(N, L, D_MODEL) @ p["merge_w"]
    msg = _layernorm(msg, p["norm1_g"], p["norm1_b"])
    msg = msg * (1.0 + scale2) + shift2
    h = jnp.concatenate([x, msg], axis=-1)
    h = jnp.maximum(h @ p["mlp_w1"], 0.0)
    m = _layernorm(h @ p["mlp_w2"], p["norm2_g"], p["norm2_b"])
    return x + m


if __name__ == "__main__":
    key = jax.random.PRNGKey(0)
    k_feat, k_params = jax.random.split(key)

    N, L, num_layer = 4, 64, 2
    feat = jax.random.normal(k_feat, (N, L, D_MODEL), jnp.float32)
    params = [init_layer_params(k) for k in jax.random.split(k_params, num_layer)]

    # auto b_tile -> 2: grid (2 batch tiles x 2 layers), >=2 parallel steps,
    # exercises the resident layer-carry output block and the message scratch.
    out = local_feature_transformer(feat, params, mask=None)
    out = jax.block_until_ready(out)

    ref = feat
    for p in params:
        ref = _layer_ref(ref, p, None)
    ref = jax.block_until_ready(ref)

    assert out.shape == (N, L, D_MODEL)
    max_err = float(jnp.max(jnp.abs(out - ref)))
    # bf16 MXU operands (f32 accumulation / f32 LayerNorm) vs. pure-f32 reference.
    assert jnp.allclose(out, ref, rtol=3e-2, atol=3e-2), max_err
    print("KERNEL_OK")
</pallas_src>

<mosaic_0001>
module attributes {stable_mosaic.version = 11 : i64} {
  func.func @_loftr_stack_kernel(%arg0: i32, %arg1: i32, %arg2: memref<2x64x64xf32, #tpu.memory_space<vmem>>, %arg3: memref<1x448x192xbf16, #tpu.memory_space<vmem>>, %arg4: memref<1x8x64xf32, #tpu.memory_space<vmem>>, %arg5: memref<2x64x64xf32, #tpu.memory_space<vmem>>, %arg6: memref<128x64xf32, #tpu.memory_space<vmem>>) attributes {dimension_semantics = [#tpu.dimension_semantics<parallel>, #tpu.dimension_semantics<arbitrary>], iteration_bounds = array<i64: 2, 2>, scalar_prefetch = 0 : i64, scratch_operands = 1 : i64, tpu.core_type = #tpu.core_type<tc>, window_params = [{transform_indices = @transform_0, window_bounds = array<i64: 2, 64, 64>}, {transform_indices = @transform_1, window_bounds = array<i64: 1, 448, 192>}, {transform_indices = @transform_2, window_bounds = array<i64: 1, 8, 64>}, {transform_indices = @transform_3, window_bounds = array<i64: 2, 64, 64>}]} {
    %c0_i32 = arith.constant 0 : i32
    %0 = arith.cmpi eq, %arg1, %c0_i32 : i32
    %1 = arith.extui %0 : i1 to i32
    %c0_i32_0 = arith.constant 0 : i32
    %2 = arith.cmpi ne, %1, %c0_i32_0 : i32
    scf.if %2 {
      %c0_57 = arith.constant 0 : index
      %c0_58 = arith.constant 0 : index
      %c0_59 = arith.constant 0 : index
      %178 = vector.load %arg2[%c0_57, %c0_58, %c0_59] : memref<2x64x64xf32, #tpu.memory_space<vmem>>, vector<2x64x64xf32>
      %c0_60 = arith.constant 0 : index
      %c0_61 = arith.constant 0 : index
      %c0_62 = arith.constant 0 : index
      %179 = vector.load %arg5[%c0_60, %c0_61, %c0_62] : memref<2x64x64xf32, #tpu.memory_space<vmem>>, vector<2x64x64xf32>
      tpu.vector_store %arg5[%c0_60, %c0_61, %c0_62], %178 {strides = array<i32>} : memref<2x64x64xf32, #tpu.memory_space<vmem>>, vector<2x64x64xf32>,
    } else {
    }
    %c0 = arith.constant 0 : index
    %c0_1 = arith.constant 0 : index
    %c0_2 = arith.constant 0 : index
    %3 = vector.load %arg3[%c0, %c0_1, %c0_2] : memref<1x448x192xbf16, #tpu.memory_space<vmem>>, vector<1x448x192xbf16>
    %4 = vector.shape_cast %3 : vector<1x448x192xbf16> to vector<448x192xbf16>
    %5 = vector.extract_strided_slice %4 {offsets = [0, 0], sizes = [64, 192], strides = [1, 1]} : vector<448x192xbf16> to vector<64x192xbf16>
    %6 = vector.extract_strided_slice %4 {offsets = [64, 0], sizes = [64, 64], strides = [1, 1]} : vector<448x192xbf16> to vector<64x64xbf16>
    %7 = vector.extract_strided_slice %4 {offsets = [128, 0], sizes = [64, 64], strides = [1, 1]} : vector<448x192xbf16> to vector<64x64xbf16>
    %8 = vector.extract_strided_slice %4 {offsets = [192, 0], sizes = [64, 128], strides = [1, 1]} : vector<448x192xbf16> to vector<64x128xbf16>
    %9 = vector.extract_strided_slice %4 {offsets = [256, 0], sizes = [64, 128], strides = [1, 1]} : vector<448x192xbf16> to vector<64x128xbf16>
    %10 = vector.extract_strided_slice %4 {offsets = [320, 0], sizes = [128, 64], strides = [1, 1]} : vector<448x192xbf16> to vector<128x64xbf16>
    %c0_3 = arith.constant 0 : index
    %c0_4 = arith.constant 0 : index
    %c0_5 = arith.constant 0 : index
    %11 = vector.load %arg4[%c0_3, %c0_4, %c0_5] : memref<1x8x64xf32, #tpu.memory_space<vmem>>, vector<1x8x64xf32>
    %12 = vector.shape_cast %11 : vector<1x8x64xf32> to vector<8x64xf32>
    %13 = vector.extract_strided_slice %12 {offsets = [0, 0], sizes = [1, 64], strides = [1, 1]} : vector<8x64xf32> to vector<1x64xf32>
    %14 = vector.extract_strided_slice %12 {offsets = [1, 0], sizes = [1, 64], strides = [1, 1]} : vector<8x64xf32> to vector<1x64xf32>
    %15 = vector.extract_strided_slice %12 {offsets = [2, 0], sizes = [1, 64], strides = [1, 1]} : vector<8x64xf32> to vector<1x64xf32>
    %16 = vector.extract_strided_slice %12 {offsets = [3, 0], sizes = [1, 64], strides = [1, 1]} : vector<8x64xf32> to vector<1x64xf32>
    %17 = vector.extract_strided_slice %12 {offsets = [4, 0], sizes = [1, 64], strides = [1, 1]} : vector<8x64xf32> to vector<1x64xf32>
    %18 = vector.extract_strided_slice %12 {offsets = [5, 0], sizes = [1, 64], strides = [1, 1]} : vector<8x64xf32> to vector<1x64xf32>
    %19 = vector.extract_strided_slice %12 {offsets = [6, 0], sizes = [1, 64], strides = [1, 1]} : vector<8x64xf32> to vector<1x64xf32>
    %c0_6 = arith.constant 0 : index
    %c0_7 = arith.constant 0 : index
    %c0_8 = arith.constant 0 : index
    %20 = vector.load %arg5[%c0_6, %c0_7, %c0_8] : memref<2x64x64xf32, #tpu.memory_space<vmem>>, vector<2x64x64xf32>
    %21 = vector.shape_cast %20 : vector<2x64x64xf32> to vector<128x64xf32>
    %22 = arith.truncf %21 : vector<128x64xf32> to vector<128x64xbf16>
    %cst = arith.constant dense<0.000000e+00> : vector<128x64xf32>
    %23 = tpu.matmul %22, %6, %cst {dimension_numbers = #tpu.dot_dimension_numbers<[1], [0], [0], [1], [0, 0, 1, 1], [], []>} : vector<128x64xbf16>, vector<64x64xbf16>, vector<128x64xf32> -> vector<128x64xf32>
    %24 = vector.broadcast %13 : vector<1x64xf32> to vector<128x64xf32>
    %25 = arith.addf %23, %24 : vector<128x64xf32>
    %cst_9 = arith.constant dense<0.000000e+00> : vector<128xf32>
    %26 = vector.multi_reduction <add>, %25, %cst_9 [1] : vector<128x64xf32> to vector<128xf32>
    %27 = vector.shape_cast %26 : vector<128xf32> to vector<128x1xf32>
    %cst_10 = arith.constant 6.400000e+01 : f32
    %28 = vector.broadcast %cst_10 : f32 to vector<128x1xf32>
    %29 = arith.divf %27, %28 : vector<128x1xf32>
    %30 = vector.broadcast %29 : vector<128x1xf32> to vector<128x64xf32>
    %31 = arith.subf %25, %30 : vector<128x64xf32>
    %32 = arith.mulf %31, %31 : vector<128x64xf32>
    %cst_11 = arith.constant dense<0.000000e+00> : vector<128xf32>
    %33 = vector.multi_reduction <add>, %32, %cst_11 [1] : vector<128x64xf32> to vector<128xf32>
    %34 = vector.shape_cast %33 : vector<128xf32> to vector<128x1xf32>
    %cst_12 = arith.constant 6.400000e+01 : f32
    %35 = vector.broadcast %cst_12 : f32 to vector<128x1xf32>
    %36 = arith.divf %34, %35 : vector<128x1xf32>
    %37 = vector.broadcast %29 : vector<128x1xf32> to vector<128x64xf32>
    %38 = arith.subf %25, %37 : vector<128x64xf32>
    %cst_13 = arith.constant 9.99999974E-6 : f32
    %39 = vector.broadcast %cst_13 : f32 to vector<128x1xf32>
    %40 = arith.addf %36, %39 : vector<128x1xf32>
    %41 = math.rsqrt %40 : vector<128x1xf32>
    %42 = vector.broadcast %41 : vector<128x1xf32> to vector<128x64xf32>
    %43 = arith.mulf %38, %42 : vector<128x64xf32>
    %44 = vector.broadcast %14 : vector<1x64xf32> to vector<128x64xf32>
    %45 = arith.mulf %43, %44 : vector<128x64xf32>
    %46 = vector.broadcast %15 : vector<1x64xf32> to vector<128x64xf32>
    %47 = arith.addf %45, %46 : vector<128x64xf32>
    %48 = arith.truncf %47 : vector<128x64xf32> to vector<128x64xbf16>
    %cst_14 = arith.constant dense<0.000000e+00> : vector<128x192xf32>
    %49 = tpu.matmul %48, %5, %cst_14 {dimension_numbers = #tpu.dot_dimension_numbers<[1], [0], [0], [1], [0, 0, 1, 1], [], []>} : vector<128x64xbf16>, vector<64x192xbf16>, vector<128x192xf32> -> vector<128x192xf32>
    %50 = vector.extract_strided_slice %49 {offsets = [0, 0], sizes = [128, 64], strides = [1, 1]} : vector<128x192xf32> to vector<128x64xf32>
    %51 = vector.extract_strided_slice %49 {offsets = [0, 64], sizes = [128, 64], strides = [1, 1]} : vector<128x192xf32> to vector<128x64xf32>
    %52 = vector.extract_strided_slice %49 {offsets = [0, 128], sizes = [128, 64], strides = [1, 1]} : vector<128x192xf32> to vector<128x64xf32>
    %cst_15 = arith.constant 0.000000e+00 : f32
    %53 = vector.broadcast %cst_15 : f32 to vector<128x64xf32>
    %54 = arith.cmpf ogt, %50, %53 : vector<128x64xf32>
    %cst_16 = arith.constant 1.000000e+00 : f32
    %55 = vector.broadcast %cst_16 : f32 to vector<128x64xf32>
    %56 = arith.addf %50, %55 : vector<128x64xf32>
    %cst_17 = arith.constant 0.000000e+00 : f32
    %57 = vector.broadcast %cst_17 : f32 to vector<128x64xf32>
    %58 = arith.minimumf %50, %57 : vector<128x64xf32>
    %59 = math.exp %58 : vector<128x64xf32>
    %60 = arith.select %54, %56, %59 : vector<128x64xi1>, vector<128x64xf32>
    %cst_18 = arith.constant 0.000000e+00 : f32
    %61 = vector.broadcast %cst_18 : f32 to vector<128x64xf32>
    %62 = arith.cmpf ogt, %51, %61 : vector<128x64xf32>
    %cst_19 = arith.constant 1.000000e+00 : f32
    %63 = vector.broadcast %cst_19 : f32 to vector<128x64xf32>
    %64 = arith.addf %51, %63 : vector<128x64xf32>
    %cst_20 = arith.constant 0.000000e+00 : f32
    %65 = vector.broadcast %cst_20 : f32 to vector<128x64xf32>
    %66 = arith.minimumf %51, %65 : vector<128x64xf32>
    %67 = math.exp %66 : vector<128x64xf32>
    %68 = arith.select %62, %64, %67 : vector<128x64xi1>, vector<128x64xf32>
    %69 = tpu.iota {dimensions = array<i32: 0>} : vector<64x128xi32>
    %70 = tpu.iota {dimensions = array<i32: 1>} : vector<64x128xi32>
    %c5_i32 = arith.constant 5 : i32
    %71 = vector.broadcast %c5_i32 : i32 to vector<64x128xi32>
    %72 = arith.shrsi %69, %71 : vector<64x128xi32>
    %c5_i32_21 = arith.constant 5 : i32
    %73 = vector.broadcast %c5_i32_21 : i32 to vector<64x128xi32>
    %74 = arith.shrsi %70, %73 : vector<64x128xi32>
    %c1_i32 = arith.constant 1 : i32
    %75 = vector.broadcast %c1_i32 : i32 to vector<64x128xi32>
    %76 = arith.andi %74, %75 : vector<64x128xi32>
    %77 = arith.cmpi eq, %72, %76 : vector<64x128xi32>
    %cst_22 = arith.constant 1.000000e+00 : f32
    %cst_23 = arith.constant 0.000000e+00 : f32
    %78 = vector.broadcast %cst_22 : f32 to vector<64x128xf32>
    %79 = vector.broadcast %cst_23 : f32 to vector<64x128xf32>
    %80 = arith.select %77, %78, %79 : vector<64x128xi1>, vector<64x128xf32>
    %81 = arith.truncf %60 : vector<128x64xf32> to vector<128x64xbf16>
    %82 = arith.truncf %68 : vector<128x64xf32> to vector<128x64xbf16>
    %cst_24 = arith.constant 1.562500e-02 : f32
    %83 = vector.broadcast %cst_24 : f32 to vector<128x64xf32>
    %84 = arith.mulf %52, %83 : vector<128x64xf32>
    %cst_25 = arith.constant 1.000000e+00 : f32
    %85 = vector.broadcast %cst_25 : f32 to vector<128x64xf32>
    %86 = tpu.concatenate %84, %85 in 1 : vector<128x64xf32>, vector<128x64xf32> -> vector<128x128xf32>
    %87 = arith.truncf %86 : vector<128x128xf32> to vector<128x128xbf16>
    %88 = vector.extract_strided_slice %82 {offsets = [0, 0], sizes = [64, 64], strides = [1, 1]} : vector<128x64xbf16> to vector<64x64xbf16>
    %89 = vector.extract_strided_slice %87 {offsets = [0, 0], sizes = [64, 128], strides = [1, 1]} : vector<128x128xbf16> to vector<64x128xbf16>
    %cst_26 = arith.constant dense<0.000000e+00> : vector<64x128xf32>
    %90 = tpu.matmul %88, %89, %cst_26 {dimension_numbers = #tpu.dot_dimension_numbers<[0], [0], [1], [1], [0, 1, 1, 1], [], []>} : vector<64x64xbf16>, vector<64x128xbf16>, vector<64x128xf32> -> vector<64x128xf32>
    %91 = arith.mulf %90, %80 : vector<64x128xf32>
    %92 = arith.truncf %91 : vector<64x128xf32> to vector<64x128xbf16>
    %93 = vector.extract_strided_slice %81 {offsets = [0, 0], sizes = [64, 64], strides = [1, 1]} : vector<128x64xbf16> to vector<64x64xbf16>
    %cst_27 = arith.constant dense<0.000000e+00> : vector<64x128xf32>
    %94 = tpu.matmul %93, %92, %cst_27 {dimension_numbers = #tpu.dot_dimension_numbers<[1], [0], [0], [1], [0, 0, 1, 1], [], []>} : vector<64x64xbf16>, vector<64x128xbf16>, vector<64x128xf32> -> vector<64x128xf32>
    %95 = vector.extract_strided_slice %94 {offsets = [0, 0], sizes = [64, 64], strides = [1, 1]} : vector<64x128xf32> to vector<64x64xf32>
    %96 = vector.extract_strided_slice %94 {offsets = [0, 64], sizes = [64, 64], strides = [1, 1]} : vector<64x128xf32> to vector<64x64xf32>
    %cst_28 = arith.constant 9.99999997E-7 : f32
    %97 = vector.broadcast %cst_28 : f32 to vector<64x64xf32>
    %98 = arith.addf %96, %97 : vector<64x64xf32>
    %99 = tpu.reciprocal %98 {approx = true} : vector<64x64xf32> -> vector<64x64xf32>
    %100 = arith.mulf %95, %99 : vector<64x64xf32>
    %cst_29 = arith.constant 6.400000e+01 : f32
    %101 = vector.broadcast %cst_29 : f32 to vector<64x64xf32>
    %102 = arith.mulf %100, %101 : vector<64x64xf32>
    %c0_30 = arith.constant 0 : index
    %c0_31 = arith.constant 0 : index
    %103 = vector.load %arg6[%c0_30, %c0_31] : memref<128x64xf32, #tpu.memory_space<vmem>>, vector<64x64xf32>
    tpu.vector_store %arg6[%c0_30, %c0_31], %102 {strides = array<i32>} : memref<128x64xf32, #tpu.memory_space<vmem>>, vector<64x64xf32>,
    %104 = vector.extract_strided_slice %82 {offsets = [64, 0], sizes = [64, 64], strides = [1, 1]} : vector<128x64xbf16> to vector<64x64xbf16>
    %105 = vector.extract_strided_slice %87 {offsets = [64, 0], sizes = [64, 128], strides = [1, 1]} : vector<128x128xbf16> to vector<64x128xbf16>
    %cst_32 = arith.constant dense<0.000000e+00> : vector<64x128xf32>
    %106 = tpu.matmul %104, %105, %cst_32 {dimension_numbers = #tpu.dot_dimension_numbers<[0], [0], [1], [1], [0, 1, 1, 1], [], []>} : vector<64x64xbf16>, vector<64x128xbf16>, vector<64x128xf32> -> vector<64x128xf32>
    %107 = arith.mulf %106, %80 : vector<64x128xf32>
    %108 = arith.truncf %107 : vector<64x128xf32> to vector<64x128xbf16>
    %109 = vector.extract_strided_slice %81 {offsets = [64, 0], sizes = [64, 64], strides = [1, 1]} : vector<128x64xbf16> to vector<64x64xbf16>
    %cst_33 = arith.constant dense<0.000000e+00> : vector<64x128xf32>
    %110 = tpu.matmul %109, %108, %cst_33 {dimension_numbers = #tpu.dot_dimension_numbers<[1], [0], [0], [1], [0, 0, 1, 1], [], []>} : vector<64x64xbf16>, vector<64x128xbf16>, vector<64x128xf32> -> vector<64x128xf32>
    %111 = vector.extract_strided_slice %110 {offsets = [0, 0], sizes = [64, 64], strides = [1, 1]} : vector<64x128xf32> to vector<64x64xf32>
    %112 = vector.extract_strided_slice %110 {offsets = [0, 64], sizes = [64, 64], strides = [1, 1]} : vector<64x128xf32> to vector<64x64xf32>
    %cst_34 = arith.constant 9.99999997E-7 : f32
    %113 = vector.broadcast %cst_34 : f32 to vector<64x64xf32>
    %114 = arith.addf %112, %113 : vector<64x64xf32>
    %115 = tpu.reciprocal %114 {approx = true} : vector<64x64xf32> -> vector<64x64xf32>
    %116 = arith.mulf %111, %115 : vector<64x64xf32>
    %cst_35 = arith.constant 6.400000e+01 : f32
    %117 = vector.broadcast %cst_35 : f32 to vector<64x64xf32>
    %118 = arith.mulf %116, %117 : vector<64x64xf32>
    %c64 = arith.constant 64 : index
    %c0_36 = arith.constant 0 : index
    %119 = vector.load %arg6[%c64, %c0_36] : memref<128x64xf32, #tpu.memory_space<vmem>>, vector<64x64xf32>
    tpu.vector_store %arg6[%c64, %c0_36], %118 {strides = array<i32>} : memref<128x64xf32, #tpu.memory_space<vmem>>, vector<64x64xf32>,
    %c0_37 = arith.constant 0 : index
    %c0_38 = arith.constant 0 : index
    %120 = vector.load %arg6[%c0_37, %c0_38] : memref<128x64xf32, #tpu.memory_space<vmem>>, vector<128x64xf32>
    %121 = arith.truncf %120 : vector<128x64xf32> to vector<128x64xbf16>
    %cst_39 = arith.constant dense<0.000000e+00> : vector<128x64xf32>
    %122 = tpu.matmul %121, %7, %cst_39 {dimension_numbers = #tpu.dot_dimension_numbers<[1], [0], [0], [1], [0, 0, 1, 1], [], []>} : vector<128x64xbf16>, vector<64x64xbf16>, vector<128x64xf32> -> vector<128x64xf32>
    %cst_40 = arith.constant dense<0.000000e+00> : vector<128xf32>
    %123 = vector.multi_reduction <add>, %122, %cst_40 [1] : vector<128x64xf32> to vector<128xf32>
    %124 = vector.shape_cast %123 : vector<128xf32> to vector<128x1xf32>
    %cst_41 = arith.constant 6.400000e+01 : f32
    %125 = vector.broadcast %cst_41 : f32 to vector<128x1xf32>
    %126 = arith.divf %124, %125 : vector<128x1xf32>
    %127 = vector.broadcast %126 : vector<128x1xf32> to vector<128x64xf32>
    %128 = arith.subf %122, %127 : vector<128x64xf32>
    %129 = arith.mulf %128, %128 : vector<128x64xf32>
    %cst_42 = arith.constant dense<0.000000e+00> : vector<128xf32>
    %130 = vector.multi_reduction <add>, %129, %cst_42 [1] : vector<128x64xf32> to vector<128xf32>
    %131 = vector.shape_cast %130 : vector<128xf32> to vector<128x1xf32>
    %cst_43 = arith.constant 6.400000e+01 : f32
    %132 = vector.broadcast %cst_43 : f32 to vector<128x1xf32>
    %133 = arith.divf %131, %132 : vector<128x1xf32>
    %134 = vector.broadcast %126 : vector<128x1xf32> to vector<128x64xf32>
    %135 = arith.subf %122, %134 : vector<128x64xf32>
    %cst_44 = arith.constant 9.99999974E-6 : f32
    %136 = vector.broadcast %cst_44 : f32 to vector<128x1xf32>
    %137 = arith.addf %133, %136 : vector<128x1xf32>
    %138 = math.rsqrt %137 : vector<128x1xf32>
    %139 = vector.broadcast %138 : vector<128x1xf32> to vector<128x64xf32>
    %140 = arith.mulf %135, %139 : vector<128x64xf32>
    %141 = vector.broadcast %16 : vector<1x64xf32> to vector<128x64xf32>
    %142 = arith.mulf %140, %141 : vector<128x64xf32>
    %143 = vector.broadcast %17 : vector<1x64xf32> to vector<128x64xf32>
    %144 = arith.addf %142, %143 : vector<128x64xf32>
    %cst_45 = arith.constant dense<0.000000e+00> : vector<128x128xf32>
    %145 = tpu.matmul %48, %8, %cst_45 {dimension_numbers = #tpu.dot_dimension_numbers<[1], [0], [0], [1], [0, 0, 1, 1], [], []>} : vector<128x64xbf16>, vector<64x128xbf16>, vector<128x128xf32> -> vector<128x128xf32>
    %146 = arith.truncf %144 : vector<128x64xf32> to vector<128x64xbf16>
    %cst_46 = arith.constant dense<0.000000e+00> : vector<128x128xf32>
    %147 = tpu.matmul %146, %9, %cst_46 {dimension_numbers = #tpu.dot_dimension_numbers<[1], [0], [0], [1], [0, 0, 1, 1], [], []>} : vector<128x64xbf16>, vector<64x128xbf16>, vector<128x128xf32> -> vector<128x128xf32>
    %148 = arith.addf %145, %147 : vector<128x128xf32>
    %cst_47 = arith.constant 0.000000e+00 : f32
    %149 = vector.broadcast %cst_47 : f32 to vector<128x128xf32>
    %150 = arith.maximumf %148, %149 : vector<128x128xf32>
    %151 = arith.truncf %150 : vector<128x128xf32> to vector<128x128xbf16>
    %cst_48 = arith.constant dense<0.000000e+00> : vector<128x64xf32>
    %152 = tpu.matmul %151, %10, %cst_48 {dimension_numbers = #tpu.dot_dimension_numbers<[1], [0], [0], [1], [0, 0, 1, 1], [], []>} : vector<128x128xbf16>, vector<128x64xbf16>, vector<128x64xf32> -> vector<128x64xf32>
    %cst_49 = arith.constant dense<0.000000e+00> : vector<128xf32>
    %153 = vector.multi_reduction <add>, %152, %cst_49 [1] : vector<128x64xf32> to vector<128xf32>
    %154 = vector.shape_cast %153 : vector<128xf32> to vector<128x1xf32>
    %cst_50 = arith.constant 6.400000e+01 : f32
    %155 = vector.broadcast %cst_50 : f32 to vector<128x1xf32>
    %156 = arith.divf %154, %155 : vector<128x1xf32>
    %157 = vector.broadcast %156 : vector<128x1xf32> to vector<128x64xf32>
    %158 = arith.subf %152, %157 : vector<128x64xf32>
    %159 = arith.mulf %158, %158 : vector<128x64xf32>
    %cst_51 = arith.constant dense<0.000000e+00> : vector<128xf32>
    %160 = vector.multi_reduction <add>, %159, %cst_51 [1] : vector<128x64xf32> to vector<128xf32>
    %161 = vector.shape_cast %160 : vector<128xf32> to vector<128x1xf32>
    %cst_52 = arith.constant 6.400000e+01 : f32
    %162 = vector.broadcast %cst_52 : f32 to vector<128x1xf32>
    %163 = arith.divf %161, %162 : vector<128x1xf32>
    %164 = vector.broadcast %156 : vector<128x1xf32> to vector<128x64xf32>
    %165 = arith.subf %152, %164 : vector<128x64xf32>
    %cst_53 = arith.constant 9.99999974E-6 : f32
    %166 = vector.broadcast %cst_53 : f32 to vector<128x1xf32>
    %167 = arith.addf %163, %166 : vector<128x1xf32>
    %168 = math.rsqrt %167 : vector<128x1xf32>
    %169 = vector.broadcast %168 : vector<128x1xf32> to vector<128x64xf32>
    %170 = arith.mulf %165, %169 : vector<128x64xf32>
    %171 = vector.broadcast %18 : vector<1x64xf32> to vector<128x64xf32>
    %172 = arith.mulf %170, %171 : vector<128x64xf32>
    %173 = vector.broadcast %19 : vector<1x64xf32> to vector<128x64xf32>
    %174 = arith.addf %172, %173 : vector<128x64xf32>
    %175 = arith.addf %47, %174 : vector<128x64xf32>
    %176 = vector.shape_cast %175 : vector<128x64xf32> to vector<2x64x64xf32>
    %c0_54 = arith.constant 0 : index
    %c0_55 = arith.constant 0 : index
    %c0_56 = arith.constant 0 : index
    %177 = vector.load %arg5[%c0_54, %c0_55, %c0_56] : memref<2x64x64xf32, #tpu.memory_space<vmem>>, vector<2x64x64xf32>
    tpu.vector_store %arg5[%c0_54, %c0_55, %c0_56], %176 {strides = array<i32>} : memref<2x64x64xf32, #tpu.memory_space<vmem>>, vector<2x64x64xf32>,
    return
  }
  func.func @transform_0(%arg0: i32, %arg1: i32) -> (i32, i32, i32) {
    %c0_i32 = arith.constant 0 : i32
    %c0_i32_0 = arith.constant 0 : i32
    %c0_i32_1 = arith.constant 0 : i32
    return %arg0, %c0_i32, %c0_i32_0 : i32, i32, i32
  }
  func.func @transform_1(%arg0: i32, %arg1: i32) -> (i32, i32, i32) {
    %c0_i32 = arith.constant 0 : i32
    %c0_i32_0 = arith.constant 0 : i32
    %c0_i32_1 = arith.constant 0 : i32
    return %arg1, %c0_i32, %c0_i32_0 : i32, i32, i32
  }
  func.func @transform_2(%arg0: i32, %arg1: i32) -> (i32, i32, i32) {
    %c0_i32 = arith.constant 0 : i32
    %c0_i32_0 = arith.constant 0 : i32
    %c0_i32_1 = arith.constant 0 : i32
    return %arg1, %c0_i32, %c0_i32_0 : i32, i32, i32
  }
  func.func @transform_3(%arg0: i32, %arg1: i32) -> (i32, i32, i32) {
    %c0_i32 = arith.constant 0 : i32
    %c0_i32_0 = arith.constant 0 : i32
    %c0_i32_1 = arith.constant 0 : i32
    return %arg0, %c0_i32, %c0_i32_0 : i32, i32, i32
  }
}

</mosaic_0001>

<llo_original>
// kernel: tpu_custom_call.1
$region0: #{tpu_custom_call.1}
  #allocation0 [shape = 'u32[]', space=smem, size = 0x4, offset = 0x4, fixed_abs, tag = 'smem constant byte address 0x4 - core index']
  #allocation1 [shape = 'u32[144,128]{1,0:T(1,128)}', space=vmem, size = 0x12000, scoped, tag = 'internal scratch']
  #allocation2 [shape = 'f32[128,64]{1,0:T(8,128)}', space=vmem, size = 0x10000, scoped, tag = 'scratch operand']
  %s0 = inlined_call_operand.vmem [shape: f32[4,64,64], index: 0, kind: input, shape index: {}]
  %s1 = inlined_call_operand.vmem [shape: bf16[2,448,192], index: 1, kind: input, shape index: {}]
  %s2 = inlined_call_operand.vmem [shape: f32[2,8,64], index: 2, kind: input, shape index: {}]
  %s3 = inlined_call_operand.hbm [shape: f32[4,64,64], index: 3, kind: output, shape index: {}]
  %s4 = sld [smem:[#allocation0]]
  $region49: #{tpu_custom_call.1} parent=0
    _
  %s6 = ssub.s32 1, %s4
  %s7 = scalar_select 0, %s6, %s4
  $region1: #{tpu_custom_call.1} parent=0
    #allocation3 [shape = 'u8[131072]{0}', space=vmem, size = 0x20000, scoped, tag = 'output window, operand 0']
    #allocation4 [shape = 's32[2]{0}', space=sflag, size = 0x8, scoped, tag = 'scoped memory for tpu_custom_call.1']
    %8 = vsyncpa [#allocation4], 0
    %s9 = scalar_lea.sflag [#allocation4], 1
    %10 = vsyncpa %s9, 0
    loop: start=0, step=1, limit=6
    $region2: #{tpu_custom_call.1} parent=1 // loop_pre_header
      _
    $region3: #{tpu_custom_call.1} parent=1 // loop_header
      %s12 = sphi 0, %s16
      %p13 = scmp.ge.s32.totalorder %s12, 6
      %s19 = sphi 0, %s31
      %s20 = sphi 0, %s27
      %s21 = sphi 0, %s19
      %s22 = sphi 0, %s20
      %s23 = sphi 0, %s21
      %s24 = sphi 0, %s22
      %s34 = sphi 0, %s36
      %s37 = sphi 0, %s34
      %s38 = sphi 0, %s37
      %s54 = sphi 0, %s38
      %s60 = sphi 0, %s62
      %s63 = sphi 0, %s60
      %s64 = sphi 0, %s63
      %s80 = sphi 0, %s64
      %s86 = sphi 0, %s88
      %s89 = sphi 0, %s86
      %s90 = sphi 0, %s89
      %s106 = sphi 0, %s90
      %s112 = sphi 0, %s114
      %s115 = sphi 0, %s112
      %s116 = sphi 0, %s115
      %s132 = sphi 0, %s116
    $region4: #{tpu_custom_call.1} parent=1 // loop_header_branch
      %15 = sbr.rel (%p13) target = $region8
    $region5: #{tpu_custom_call.1} parent=1 // loop_body
      %s17 = ssub.s32 %s12, 1
      %s18 = ssub.s32 %s12, 2
      %s25 = sadd.s32 1, %s20
      %p26 = scmp.ge.s32.totalorder %s25, 2
      %s27 = scalar_select %p26, 0, %s25
      %s28 = sadd.s32 1, %s19
      %s29 = scalar_select %p26, %s28, %s19
      %p30 = scmp.ge.s32.totalorder %s29, 2
      %s31 = scalar_select %p30, 0, %s29
      %s32 = ssub.s32 %s19, %s31
      %p33 = scmp.eq.s32.totalorder %s32, 0
      %s35 = sadd.s32 %s34, 1
      %s36 = scalar_select %p33, %s34, %s35
      %p39 = pneg %p33
      %p40 = scmp.eq.s32.totalorder %s12, 3
      %p41 = por %p39, %p40
      %p42 = scmp.ne.s32.totalorder %s34, %s37
      %p43 = scmp.eq.s32.totalorder %s12, 0
      %p44 = por %p42, %p43
      %p45 = scmp.ne.s32.totalorder %s34, %s37
      %p46 = scmp.eq.s32.totalorder %s17, 3
      %p47 = por %p45, %p46
      %p48 = scmp.ne.s32.totalorder %s37, %s38
      %p49 = scmp.eq.s32.totalorder %s17, 0
      %p50 = por %p48, %p49
      %p51 = scmp.ne.s32.totalorder %s37, %s38
      %p52 = scmp.eq.s32.totalorder %s18, 3
      %p53 = por %p51, %p52
      %p55 = scmp.ne.s32.totalorder %s38, %s54
      %p56 = scmp.eq.s32.totalorder %s18, 0
      %p57 = por %p55, %p56
      %s58 = ssub.s32 %s20, %s27
      %p59 = scmp.eq.s32.totalorder %s58, 0
      %s61 = sadd.s32 %s60, 1
      %s62 = scalar_select %p59, %s60, %s61
      %p65 = pneg %p59
      %p66 = scmp.eq.s32.totalorder %s12, 3
      %p67 = por %p65, %p66
      %p68 = scmp.ne.s32.totalorder %s60, %s63
      %p69 = scmp.eq.s32.totalorder %s12, 0
      %p70 = por %p68, %p69
      %p71 = scmp.ne.s32.totalorder %s60, %s63
      %p72 = scmp.eq.s32.totalorder %s17, 3
      %p73 = por %p71, %p72
      %p74 = scmp.ne.s32.totalorder %s63, %s64
      %p75 = scmp.eq.s32.totalorder %s17, 0
      %p76 = por %p74, %p75
      %p77 = scmp.ne.s32.totalorder %s63, %s64
      %p78 = scmp.eq.s32.totalorder %s18, 3
      %p79 = por %p77, %p78
      %p81 = scmp.ne.s32.totalorder %s64, %s80
      %p82 = scmp.eq.s32.totalorder %s18, 0
      %p83 = por %p81, %p82
      %s84 = ssub.s32 %s20, %s27
      %p85 = scmp.eq.s32.totalorder %s84, 0
      %s87 = sadd.s32 %s86, 1
      %s88 = scalar_select %p85, %s86, %s87
      %p91 = pneg %p85
      %p92 = scmp.eq.s32.totalorder %s12, 3
      %p93 = por %p91, %p92
      %p94 = scmp.ne.s32.totalorder %s86, %s89
      %p95 = scmp.eq.s32.totalorder %s12, 0
      %p96 = por %p94, %p95
      %p97 = scmp.ne.s32.totalorder %s86, %s89
      %p98 = scmp.eq.s32.totalorder %s17, 3
      %p99 = por %p97, %p98
      %p100 = scmp.ne.s32.totalorder %s89, %s90
      %p101 = scmp.eq.s32.totalorder %s17, 0
      %p102 = por %p100, %p101
      %p103 = scmp.ne.s32.totalorder %s89, %s90
      %p104 = scmp.eq.s32.totalorder %s18, 3
      %p105 = por %p103, %p104
      %p107 = scmp.ne.s32.totalorder %s90, %s106
      %p108 = scmp.eq.s32.totalorder %s18, 0
      %p109 = por %p107, %p108
      %s110 = ssub.s32 %s19, %s31
      %p111 = scmp.eq.s32.totalorder %s110, 0
      %s113 = sadd.s32 %s112, 1
      %s114 = scalar_select %p111, %s112, %s113
      %p117 = pneg %p111
      %p118 = scmp.eq.s32.totalorder %s12, 3
      %p119 = por %p117, %p118
      %p120 = scmp.ne.s32.totalorder %s112, %s115
      %p121 = scmp.eq.s32.totalorder %s12, 0
      %p122 = por %p120, %p121
      %p123 = scmp.ne.s32.totalorder %s112, %s115
      %p124 = scmp.eq.s32.totalorder %s17, 3
      %p125 = por %p123, %p124
      %p126 = scmp.ne.s32.totalorder %s115, %s116
      %p127 = scmp.eq.s32.totalorder %s17, 0
      %p128 = por %p126, %p127
      %p129 = scmp.ne.s32.totalorder %s115, %s116
      %p130 = scmp.eq.s32.totalorder %s18, 3
      %p131 = por %p129, %p130
      %p133 = scmp.ne.s32.totalorder %s116, %s132
      %p134 = scmp.eq.s32.totalorder %s18, 0
      %p135 = por %p133, %p134
      %p136 = scmp.le.s32.totalorder 1, %s12
      %p137 = scmp.lt.s32.totalorder %s12, 5
      %p138 = pnand %p136, %p137
      %p139 = pneg %p138
      // Predicated region
      $region9: #{tpu_custom_call.1} parent=5 // pred_check
        _
      $region10: #{tpu_custom_call.1} parent=5 // pred_check_branch
        %141 = sbr.rel (%p138) target = $region12
      $region11: #{tpu_custom_call.1} parent=5 // pred_region
        %s142 = ssub.s32 %s12, 1
      $region12: #{tpu_custom_call.1} parent=5 // pred_fallthru
        _
      %p143 = scmp.lt.s32.totalorder %s12, 4
      // Predicated region
      $region13: #{tpu_custom_call.1} parent=5 // pred_check
        %p144 = pneg %p143
      $region14: #{tpu_custom_call.1} parent=5 // pred_check_branch
        %146 = sbr.rel (%p144) target = $region16
      $region15: #{tpu_custom_call.1} parent=5 // pred_region
        // Predicated region
        $region17: #{tpu_custom_call.1} parent=15 // pred_check
          %p147 = pneg %p44
        $region18: #{tpu_custom_call.1} parent=15 // pred_check_branch
          %149 = sbr.rel (%p147) target = $region20
        $region19: #{tpu_custom_call.1} parent=15 // pred_region
          %s150 = smul.u32 2, %s19
          %p151 = scmp.lt.s32.totalorder %s150, 3
          %s152 = scalar_select %p151, %s150, 3
          %s153 = smul.addr %s152, 8
          %s154 = smul.addr %s153, 8
          %s155 = scalar_lea.vmem %s0, %s154
          %s156 = smul.u32 2, %s19
        $region20: #{tpu_custom_call.1} parent=15 // pred_fallthru
          _
        // Predicated region
        $region21: #{tpu_custom_call.1} parent=15 // pred_check
          %p157 = pneg %p70
        $region22: #{tpu_custom_call.1} parent=15 // pred_check_branch
          %159 = sbr.rel (%p157) target = $region24
        $region23: #{tpu_custom_call.1} parent=15 // pred_region
          %p160 = scmp.lt.s32.totalorder %s20, 1
          %s161 = scalar_select %p160, %s20, 1
          %s162 = smul.addr %s161, 112
          %s163 = smul.addr %s162, 4
          %s164 = scalar_lea.vmem %s1, %s163
        $region24: #{tpu_custom_call.1} parent=15 // pred_fallthru
          _
        // Predicated region
        $region25: #{tpu_custom_call.1} parent=15 // pred_check
          %p165 = pneg %p96
        $region26: #{tpu_custom_call.1} parent=15 // pred_check_branch
          %167 = sbr.rel (%p165) target = $region28
        $region27: #{tpu_custom_call.1} parent=15 // pred_region
          %p168 = scmp.lt.s32.totalorder %s20, 1
          %s169 = scalar_select %p168, %s20, 1
          %s170 = smul.addr %s169, 8
          %s171 = scalar_lea.vmem %s2, %s170
        $region28: #{tpu_custom_call.1} parent=15 // pred_fallthru
          _
      $region16: #{tpu_custom_call.1} parent=5 // pred_fallthru
        _
      %p172 = scmp.le.s32.totalorder 1, %s12
      %p173 = scmp.lt.s32.totalorder %s12, 5
      %p174 = pnand %p172, %p173
      %p175 = pneg %p174
      // Predicated region
      $region29: #{tpu_custom_call.1} parent=5 // pred_check
        _
      $region30: #{tpu_custom_call.1} parent=5 // pred_check_branch
        %177 = sbr.rel (%p174) target = $region32
      $region31: #{tpu_custom_call.1} parent=5 // pred_region
        %s178 = ssub.s32 %s12, 1
        %s179 = smul.u32 2, %s21
        %p180 = scmp.lt.s32.totalorder %s179, 3
        %s181 = scalar_select %p180, %s179, 3
        %s182 = smul.addr %s181, 8
        %s183 = smul.addr %s182, 8
        %s184 = scalar_lea.vmem %s0, %s183
        %p185 = pneg %p50
        %p186 = pneg %p47
        %p187 = scmp.lt.s32.totalorder %s22, 1
        %s188 = scalar_select %p187, %s22, 1
        %s189 = smul.addr %s188, 112
        %s190 = smul.addr %s189, 4
        %s191 = scalar_lea.vmem %s1, %s190
        %p192 = pneg %p76
        %p193 = pneg %p73
        %p194 = scmp.lt.s32.totalorder %s22, 1
        %s195 = scalar_select %p194, %s22, 1
        %s196 = smul.addr %s195, 8
        %s197 = scalar_lea.vmem %s2, %s196
        %p198 = pneg %p102
        %p199 = pneg %p99
        %p200 = pneg %p128
        %p201 = pneg %p125
        %s202 = sand.u32 %s115, 1
        %s203 = scalar_lea.sflag [#allocation4], %s202
        %s204 = sand.u32 %s115, 1
        %s205 = smul.addr %s204, 128
        %s206 = scalar_lea.vmem [#allocation3], %s205
        %s207 = smul.u32 2, %s21
        %p208 = scmp.lt.s32.totalorder %s207, 3
        %s209 = scalar_select %p208, %s207, 3
        %s210 = smul.addr %s209, 8
        %s211 = smul.addr %s210, 8
        %s212 = scalar_lea.vmem %s0, %s211
        %s213 = smul.u32 2, %s21
        %p214 = scmp.lt.s32.totalorder %s22, 1
        %s215 = scalar_select %p214, %s22, 1
        %s216 = smul.addr %s215, 112
        %s217 = smul.addr %s216, 4
        %s218 = scalar_lea.vmem %s1, %s217
        %p219 = scmp.lt.s32.totalorder %s22, 1
        %s220 = scalar_select %p219, %s22, 1
        %s221 = smul.addr %s220, 8
        %s222 = scalar_lea.vmem %s2, %s221
        %s223 = smul.u32 2, %s21
        %p225 = scmp.eq.s32.totalorder %s22, 0
        // Predicated region
        $region33: #{tpu_custom_call.1} parent=31 // pred_check
          %p226 = pneg %p225
        $region34: #{tpu_custom_call.1} parent=31 // pred_check_branch
          %228 = sbr.rel (%p226) target = $region36
        $region35: #{tpu_custom_call.1} parent=31 // pred_region
          %v229 = vld [vmem:[%s212] sm:$0xff]
          %v230 = vld [vmem:[%s212 + $0x8] sm:$0xff]
          %v231 = vld [vmem:[%s212 + $0x10] sm:$0xff]
          %v232 = vld [vmem:[%s212 + $0x18] sm:$0xff]
          %v233 = vld [vmem:[%s212 + $0x20] sm:$0xff]
          %v234 = vld [vmem:[%s212 + $0x28] sm:$0xff]
          %v235 = vld [vmem:[%s212 + $0x30] sm:$0xff]
          %v236 = vld [vmem:[%s212 + $0x38] sm:$0xff]
          %v237 = vld [vmem:[%s212 + $0x40] sm:$0xff]
          %v238 = vld [vmem:[%s212 + $0x48] sm:$0xff]
          %v239 = vld [vmem:[%s212 + $0x50] sm:$0xff]
          %v240 = vld [vmem:[%s212 + $0x58] sm:$0xff]
          %v241 = vld [vmem:[%s212 + $0x60] sm:$0xff]
          %v242 = vld [vmem:[%s212 + $0x68] sm:$0xff]
          %v243 = vld [vmem:[%s212 + $0x70] sm:$0xff]
          %v244 = vld [vmem:[%s212 + $0x78] sm:$0xff]
          %vm245 = vcmask 523264
          %246 = vst.msk [vmem:[%s206] sm:$0xff] %vm245, %v229
          %247 = vst.msk [vmem:[%s206 + $0x8] sm:$0xff] %vm245, %v230
          %248 = vst.msk [vmem:[%s206 + $0x10] sm:$0xff] %vm245, %v231
          %249 = vst.msk [vmem:[%s206 + $0x18] sm:$0xff] %vm245, %v232
          %250 = vst.msk [vmem:[%s206 + $0x20] sm:$0xff] %vm245, %v233
          %251 = vst.msk [vmem:[%s206 + $0x28] sm:$0xff] %vm245, %v234
          %252 = vst.msk [vmem:[%s206 + $0x30] sm:$0xff] %vm245, %v235
          %253 = vst.msk [vmem:[%s206 + $0x38] sm:$0xff] %vm245, %v236
          %254 = vst.msk [vmem:[%s206 + $0x40] sm:$0xff] %vm245, %v237
          %255 = vst.msk [vmem:[%s206 + $0x48] sm:$0xff] %vm245, %v238
          %256 = vst.msk [vmem:[%s206 + $0x50] sm:$0xff] %vm245, %v239
          %257 = vst.msk [vmem:[%s206 + $0x58] sm:$0xff] %vm245, %v240
          %258 = vst.msk [vmem:[%s206 + $0x60] sm:$0xff] %vm245, %v241
          %259 = vst.msk [vmem:[%s206 + $0x68] sm:$0xff] %vm245, %v242
          %260 = vst.msk [vmem:[%s206 + $0x70] sm:$0xff] %vm245, %v243
          %261 = vst.msk [vmem:[%s206 + $0x78] sm:$0xff] %vm245, %v244
        $region36: #{tpu_custom_call.1} parent=31 // pred_fallthru
          _
        %v262 = vld [vmem:[%s218] sm:$0xff]
        %v263 = vld [vmem:[%s218 + $0x8] sm:$0xff]
        %v264 = vld [vmem:[%s218 + $0x10] sm:$0xff]
        %v265 = vld [vmem:[%s218 + $0x18] sm:$0xff]
        %v266 = vld [vmem:[%s218 + $0x20] sm:$0xff]
        %v267 = vld [vmem:[%s218 + $0x28] sm:$0xff]
        %v268 = vld [vmem:[%s218 + $0x30] sm:$0xff]
        %v269 = vld [vmem:[%s218 + $0x38] sm:$0xff]
        %v270 = vld [vmem:[%s218 + $0x40] sm:$0xff]
        %v271 = vld [vmem:[%s218 + $0x48] sm:$0xff]
        %v272 = vld [vmem:[%s218 + $0x50] sm:$0xff]
        %v273 = vld [vmem:[%s218 + $0x58] sm:$0xff]
        %v274 = vld [vmem:[%s218 + $0x60] sm:$0xff]
        %v275 = vld [vmem:[%s218 + $0x68] sm:$0xff]
        %v276 = vld [vmem:[%s218 + $0x70] sm:$0xff]
        %v277 = vld [vmem:[%s218 + $0x78] sm:$0xff]
        %v278 = vld [vmem:[%s218 + $0x80] sm:$0xff]
        %v279 = vld [vmem:[%s218 + $0x88] sm:$0xff]
        %v280 = vld [vmem:[%s218 + $0x90] sm:$0xff]
        %v281 = vld [vmem:[%s218 + $0x98] sm:$0xff]
        %v282 = vld [vmem:[%s218 + $0xa0] sm:$0xff]
        %v283 = vld [vmem:[%s218 + $0xa8] sm:$0xff]
        %v284 = vld [vmem:[%s218 + $0xb0] sm:$0xff]
        %v285 = vld [vmem:[%s218 + $0xb8] sm:$0xff]
        %v286 = vld [vmem:[%s218 + $0xc0] sm:$0xff]
        %v287 = vld [vmem:[%s218 + $0xc8] sm:$0xff]
        %v288 = vld [vmem:[%s218 + $0xd0] sm:$0xff]
        %v289 = vld [vmem:[%s218 + $0xd8] sm:$0xff]
        %v290 = vld [vmem:[%s218 + $0xe0] sm:$0xff]
        %v291 = vld [vmem:[%s218 + $0xe8] sm:$0xff]
        %v292 = vld [vmem:[%s218 + $0xf0] sm:$0xff]
        %v293 = vld [vmem:[%s218 + $0xf8] sm:$0xff]
        %v294 = vld [vmem:[%s218 + $0x100] sm:$0xff]
        %v295 = vld [vmem:[%s218 + $0x108] sm:$0xff]
        %v296 = vld [vmem:[%s218 + $0x110] sm:$0xff]
        %v297 = vld [vmem:[%s218 + $0x118] sm:$0xff]
        %v298 = vld [vmem:[%s218 + $0x120] sm:$0xff]
        %v299 = vld [vmem:[%s218 + $0x128] sm:$0xff]
        %v300 = vld [vmem:[%s218 + $0x130] sm:$0xff]
        %v301 = vld [vmem:[%s218 + $0x138] sm:$0xff]
        %v302 = vld [vmem:[%s218 + $0x140] sm:$0xff]
        %v303 = vld [vmem:[%s218 + $0x148] sm:$0xff]
        %v304 = vld [vmem:[%s218 + $0x150] sm:$0xff]
        %v305 = vld [vmem:[%s218 + $0x158] sm:$0xff]
        %v306 = vld [vmem:[%s218 + $0x160] sm:$0xff]
        %v307 = vld [vmem:[%s218 + $0x168] sm:$0xff]
        %v308 = vld [vmem:[%s218 + $0x170] sm:$0xff]
        %v309 = vld [vmem:[%s218 + $0x178] sm:$0xff]
        %v310 = vld [vmem:[%s218 + $0x180] sm:$0xff]
        %v311 = vld [vmem:[%s218 + $0x188] sm:$0xff]
        %v312 = vld [vmem:[%s218 + $0x190] sm:$0xff]
        %v313 = vld [vmem:[%s218 + $0x198] sm:$0xff]
        %v314 = vld [vmem:[%s218 + $0x1a0] sm:$0xff]
        %v315 = vld [vmem:[%s218 + $0x1a8] sm:$0xff]
        %v316 = vld [vmem:[%s218 + $0x1b0] sm:$0xff]
        %v317 = vld [vmem:[%s218 + $0x1b8] sm:$0xff]
        %v318 = vld [vmem:[%s222] sm:$0xff]
        %v319 = vld [vmem:[%s206] sm:$0xff]
        %v320 = vld [vmem:[%s206 + $0x8] sm:$0xff]
        %v321 = vld [vmem:[%s206 + $0x10] sm:$0xff]
        %v322 = vld [vmem:[%s206 + $0x18] sm:$0xff]
        %v323 = vld [vmem:[%s206 + $0x20] sm:$0xff]
        %v324 = vld [vmem:[%s206 + $0x28] sm:$0xff]
        %v325 = vld [vmem:[%s206 + $0x30] sm:$0xff]
        %v326 = vld [vmem:[%s206 + $0x38] sm:$0xff]
        %v327 = vld [vmem:[%s206 + $0x40] sm:$0xff]
        %v328 = vld [vmem:[%s206 + $0x48] sm:$0xff]
        %v329 = vld [vmem:[%s206 + $0x50] sm:$0xff]
        %v330 = vld [vmem:[%s206 + $0x58] sm:$0xff]
        %v331 = vld [vmem:[%s206 + $0x60] sm:$0xff]
        %v332 = vld [vmem:[%s206 + $0x68] sm:$0xff]
        %v333 = vld [vmem:[%s206 + $0x70] sm:$0xff]
        %v334 = vld [vmem:[%s206 + $0x78] sm:$0xff]
        %v335 = vpack.c.bf16 %v320, %v319
        %v336 = vpack.c.bf16 %v322, %v321
        %v337 = vpack.c.bf16 %v324, %v323
        %v338 = vpack.c.bf16 %v326, %v325
        %v339 = vpack.c.bf16 %v328, %v327
        %v340 = vpack.c.bf16 %v330, %v329
        %v341 = vpack.c.bf16 %v332, %v331
        %v342 = vpack.c.bf16 %v334, %v333
        %v343 = vlaneseq
        %v344 = vshrl.u32 %v343, 7
        %v345 = vsub.s32 0, %v344
        %v346 = vrot.slane %v318, %v345
        %v355 = vunpack.c.l.b16 %v270
        %v356 = vunpack.c.l.b16 %v271
        %v357 = vunpack.c.l.b16 %v272
        %v358 = vunpack.c.l.b16 %v273
        %v359 = vunpack.c.l.b16 %v274
        %v360 = vunpack.c.l.b16 %v275
        %v361 = vunpack.c.l.b16 %v276
        %v362 = vunpack.c.l.b16 %v277
        %v363 = vpack.c.b16 %v356, %v355
        %v364 = vpack.c.b16 %v358, %v357
        %v365 = vpack.c.b16 %v360, %v359
        %v366 = vpack.c.b16 %v362, %v361
        %vm371 = vcmask 523264
        %v373 = vsel %vm371, %v335, 0
        %v376 = vsel %vm371, %v336, 0
        %v379 = vsel %vm371, %v337, 0
        %v382 = vsel %vm371, %v338, 0
        %v385 = vsel %vm371, %v339, 0
        %v388 = vsel %vm371, %v340, 0
        %v391 = vsel %vm371, %v341, 0
        %v394 = vsel %vm371, %v342, 0
        %396 = vmatprep.subr.bf16.mxu0 0
        %397 = vmatpush1.bf16.msra.mxu0 0
        %398 = vmatprep.subr.bf16.mxu0 0
        %399 = vmatpush1.bf16.msra.mxu0 0
        %400 = vmatprep.subr.bf16.mxu0 0
        %401 = vmatpush1.bf16.msra.mxu0 0
        %402 = vmatprep.subr.bf16.mxu0 0
        %403 = vmatpush1.bf16.msra.mxu0 0
        %404 = vmatprep.subr.bf16.mxu0 0
        %405 = vmatpush1.bf16.msra.mxu0 %v366
        %406 = vmatprep.subr.bf16.mxu0 0
        %407 = vmatpush1.bf16.msra.mxu0 %v365
        %408 = vmatprep.subr.bf16.mxu0 0
        %409 = vmatpush1.bf16.msra.mxu0 %v364
        %410 = vmatprep.subr.bf16.mxu0 0
        %411 = vmatpush1.bf16.msra.mxu0 %v363
        %412 = vmatprep.subr.bf16.mxu0 0
        %413 = vmatpush2.bf16.msra.mxu0 0
        %414 = vmatprep.subr.bf16.mxu0 0
        %415 = vmatpush2.bf16.msra.mxu0 0
        %416 = vmatprep.subr.bf16.mxu0 0
        %417 = vmatpush2.bf16.msra.mxu0 0
        %418 = vmatprep.subr.bf16.mxu0 0
        %419 = vmatpush2.bf16.msra.mxu0 0
        %420 = vmatprep.subr.bf16.mxu0 0
        %421 = vmatpush2.bf16.msra.mxu0 0
        %422 = vmatprep.subr.bf16.mxu0 0
        %423 = vmatpush2.bf16.msra.mxu0 0
        %424 = vmatprep.subr.bf16.mxu0 0
        %425 = vmatpush2.bf16.msra.mxu0 0
        %426 = vmatprep.subr.bf16.mxu0 0
        %427 = vmatpush2.bf16.msra.mxu0 0
        %428 = vmatprep.mubr.bf16.mxu0 0
        %429 = vmatmul.mubr.bf16.gmra.mxu0 %v373
        %v430 = vpop.f32.mrf.mxu0
        %v431 = vadd.f32 %v346, %v430
        %v432 = vpop.f32.mrf.mxu0
        %v433 = vpop.f32.mrf.mxu0
        %v434 = vadd.f32 %v346, %v433
        %v435 = vpop.f32.mrf.mxu0
        %436 = vmatprep.mubr.bf16.mxu0 0
        %437 = vmatmul.mubr.bf16.gmra.mxu0 %v376
        %v438 = vpop.f32.mrf.mxu0
        %v439 = vadd.f32 %v346, %v438
        %v440 = vpop.f32.mrf.mxu0
        %v441 = vpop.f32.mrf.mxu0
        %v442 = vadd.f32 %v346, %v441
        %v443 = vpop.f32.mrf.mxu0
        %444 = vmatprep.mubr.bf16.mxu0 0
        %445 = vmatmul.mubr.bf16.gmra.mxu0 %v379
        %v446 = vpop.f32.mrf.mxu0
        %v447 = vadd.f32 %v346, %v446
        %v448 = vpop.f32.mrf.mxu0
        %v449 = vpop.f32.mrf.mxu0
        %v450 = vadd.f32 %v346, %v449
        %v451 = vpop.f32.mrf.mxu0
        %452 = vmatprep.mubr.bf16.mxu0 0
        %453 = vmatmul.mubr.bf16.gmra.mxu0 %v382
        %v454 = vpop.f32.mrf.mxu0
        %v455 = vadd.f32 %v346, %v454
        %v456 = vpop.f32.mrf.mxu0
        %v457 = vpop.f32.mrf.mxu0
        %v458 = vadd.f32 %v346, %v457
        %v459 = vpop.f32.mrf.mxu0
        %460 = vmatprep.mubr.bf16.mxu0 0
        %461 = vmatmul.mubr.bf16.gmra.mxu0 %v385
        %v462 = vpop.f32.mrf.mxu0
        %v463 = vadd.f32 %v346, %v462
        %v464 = vpop.f32.mrf.mxu0
        %v465 = vpop.f32.mrf.mxu0
        %v466 = vadd.f32 %v346, %v465
        %v467 = vpop.f32.mrf.mxu0
        %468 = vmatprep.mubr.bf16.mxu0 0
        %469 = vmatmul.mubr.bf16.gmra.mxu0 %v388
        %v470 = vpop.f32.mrf.mxu0
        %v471 = vadd.f32 %v346, %v470
        %v472 = vpop.f32.mrf.mxu0
        %v473 = vpop.f32.mrf.mxu0
        %v474 = vadd.f32 %v346, %v473
        %v475 = vpop.f32.mrf.mxu0
        %476 = vmatprep.mubr.bf16.mxu0 0
        %477 = vmatmul.mubr.bf16.gmra.mxu0 %v391
        %v478 = vpop.f32.mrf.mxu0
        %v479 = vadd.f32 %v346, %v478
        %v480 = vpop.f32.mrf.mxu0
        %v481 = vpop.f32.mrf.mxu0
        %v482 = vadd.f32 %v346, %v481
        %v483 = vpop.f32.mrf.mxu0
        %484 = vmatprep.mubr.bf16.mxu0 0
        %485 = vmatmul.mubr.bf16.gmra.mxu0 %v394
        %v486 = vpop.f32.mrf.mxu0
        %v487 = vadd.f32 %v346, %v486
        %v488 = vpop.f32.mrf.mxu0
        %v489 = vpop.f32.mrf.mxu0
        %v490 = vadd.f32 %v346, %v489
        %v491 = vpop.f32.mrf.mxu0
        %492 = vdwg.mxu0
        %v493 = vsel %vm371, %v431, 0.0
        %494 = vadd.xlane.f32.xlu0 %v493
        %v495 = vpop.xlane.xlu0 %494
        %v496 = vsel %vm371, %v434, 0.0
        %497 = vadd.xlane.f32.xlu0 %v496
        %v498 = vpop.xlane.xlu0 %497
        %v499 = vsel %vm371, %v439, 0.0
        %500 = vadd.xlane.f32.xlu0 %v499
        %v501 = vpop.xlane.xlu0 %500
        %v502 = vsel %vm371, %v442, 0.0
        %503 = vadd.xlane.f32.xlu0 %v502
        %v504 = vpop.xlane.xlu0 %503
        %v505 = vsel %vm371, %v447, 0.0
        %506 = vadd.xlane.f32.xlu0 %v505
        %v507 = vpop.xlane.xlu0 %506
        %v508 = vsel %vm371, %v450, 0.0
        %509 = vadd.xlane.f32.xlu0 %v508
        %v510 = vpop.xlane.xlu0 %509
        %v511 = vsel %vm371, %v455, 0.0
        %512 = vadd.xlane.f32.xlu0 %v511
        %v513 = vpop.xlane.xlu0 %512
        %v514 = vsel %vm371, %v458, 0.0
        %515 = vadd.xlane.f32.xlu0 %v514
        %v516 = vpop.xlane.xlu0 %515
        %v517 = vsel %vm371, %v463, 0.0
        %518 = vadd.xlane.f32.xlu0 %v517
        %v519 = vpop.xlane.xlu0 %518
        %v520 = vsel %vm371, %v466, 0.0
        %521 = vadd.xlane.f32.xlu0 %v520
        %v522 = vpop.xlane.xlu0 %521
        %v523 = vsel %vm371, %v471, 0.0
        %524 = vadd.xlane.f32.xlu0 %v523
        %v525 = vpop.xlane.xlu0 %524
        %v526 = vsel %vm371, %v474, 0.0
        %527 = vadd.xlane.f32.xlu0 %v526
        %v528 = vpop.xlane.xlu0 %527
        %v529 = vsel %vm371, %v479, 0.0
        %530 = vadd.xlane.f32.xlu0 %v529
        %v531 = vpop.xlane.xlu0 %530
        %v532 = vsel %vm371, %v482, 0.0
        %533 = vadd.xlane.f32.xlu0 %v532
        %v534 = vpop.xlane.xlu0 %533
        %v535 = vsel %vm371, %v487, 0.0
        %536 = vadd.xlane.f32.xlu0 %v535
        %v537 = vpop.xlane.xlu0 %536
        %v538 = vsel %vm371, %v490, 0.0
        %539 = vadd.xlane.f32.xlu0 %v538
        %v540 = vpop.xlane.xlu0 %539
        %v541 = vrcp.pop 64.0
        %v542 = vmul.f32 %v495, %v541
        %v543 = vmul.f32 %v498, %v541
        %v544 = vmul.f32 %v501, %v541
        %v545 = vmul.f32 %v504, %v541
        %v546 = vmul.f32 %v507, %v541
        %v547 = vmul.f32 %v510, %v541
        %v548 = vmul.f32 %v513, %v541
        %v549 = vmul.f32 %v516, %v541
        %v550 = vmul.f32 %v519, %v541
        %v551 = vmul.f32 %v522, %v541
        %v552 = vmul.f32 %v525, %v541
        %v553 = vmul.f32 %v528, %v541
        %v554 = vmul.f32 %v531, %v541
        %v555 = vmul.f32 %v534, %v541
        %v556 = vmul.f32 %v537, %v541
        %v557 = vmul.f32 %v540, %v541
        %v558 = vsub.f32 %v431, %v542
        %v559 = vsub.f32 %v434, %v543
        %v560 = vsub.f32 %v439, %v544
        %v561 = vsub.f32 %v442, %v545
        %v562 = vsub.f32 %v447, %v546
        %v563 = vsub.f32 %v450, %v547
        %v564 = vsub.f32 %v455, %v548
        %v565 = vsub.f32 %v458, %v549
        %v566 = vsub.f32 %v463, %v550
        %v567 = vsub.f32 %v466, %v551
        %v568 = vsub.f32 %v471, %v552
        %v569 = vsub.f32 %v474, %v553
        %v570 = vsub.f32 %v479, %v554
        %v571 = vsub.f32 %v482, %v555
        %v572 = vsub.f32 %v487, %v556
        %v573 = vsub.f32 %v490, %v557
        %v574 = vmul.f32 %v558, %v558
        %v575 = vmul.f32 %v559, %v559
        %v576 = vmul.f32 %v560, %v560
        %v577 = vmul.f32 %v561, %v561
        %v578 = vmul.f32 %v562, %v562
        %v579 = vmul.f32 %v563, %v563
        %v580 = vmul.f32 %v564, %v564
        %v581 = vmul.f32 %v565, %v565
        %v582 = vmul.f32 %v566, %v566
        %v583 = vmul.f32 %v567, %v567
        %v584 = vmul.f32 %v568, %v568
        %v585 = vmul.f32 %v569, %v569
        %v586 = vmul.f32 %v570, %v570
        %v587 = vmul.f32 %v571, %v571
        %v588 = vmul.f32 %v572, %v572
        %v589 = vmul.f32 %v573, %v573
        %v590 = vsel %vm371, %v574, 0.0
        %591 = vadd.xlane.f32.xlu0 %v590
        %v592 = vpop.xlane.xlu0 %591
        %v593 = vsel %vm371, %v575, 0.0
        %594 = vadd.xlane.f32.xlu0 %v593
        %v595 = vpop.xlane.xlu0 %594
        %v596 = vsel %vm371, %v576, 0.0
        %597 = vadd.xlane.f32.xlu0 %v596
        %v598 = vpop.xlane.xlu0 %597
        %v599 = vsel %vm371, %v577, 0.0
        %600 = vadd.xlane.f32.xlu0 %v599
        %v601 = vpop.xlane.xlu0 %600
        %v602 = vsel %vm371, %v578, 0.0
        %603 = vadd.xlane.f32.xlu0 %v602
        %v604 = vpop.xlane.xlu0 %603
        %v605 = vsel %vm371, %v579, 0.0
        %606 = vadd.xlane.f32.xlu0 %v605
        %v607 = vpop.xlane.xlu0 %606
        %v608 = vsel %vm371, %v580, 0.0
        %609 = vadd.xlane.f32.xlu0 %v608
        %v610 = vpop.xlane.xlu0 %609
        %v611 = vsel %vm371, %v581, 0.0
        %612 = vadd.xlane.f32.xlu0 %v611
        %v613 = vpop.xlane.xlu0 %612
        %v614 = vsel %vm371, %v582, 0.0
        %615 = vadd.xlane.f32.xlu0 %v614
        %v616 = vpop.xlane.xlu0 %615
        %v617 = vsel %vm371, %v583, 0.0
        %618 = vadd.xlane.f32.xlu0 %v617
        %v619 = vpop.xlane.xlu0 %618
        %v620 = vsel %vm371, %v584, 0.0
        %621 = vadd.xlane.f32.xlu0 %v620
        %v622 = vpop.xlane.xlu0 %621
        %v623 = vsel %vm371, %v585, 0.0
        %624 = vadd.xlane.f32.xlu0 %v623
        %v625 = vpop.xlane.xlu0 %624
        %v626 = vsel %vm371, %v586, 0.0
        %627 = vadd.xlane.f32.xlu0 %v626
        %v628 = vpop.xlane.xlu0 %627
        %v629 = vsel %vm371, %v587, 0.0
        %630 = vadd.xlane.f32.xlu0 %v629
        %v631 = vpop.xlane.xlu0 %630
        %v632 = vsel %vm371, %v588, 0.0
        %633 = vadd.xlane.f32.xlu0 %v632
        %v634 = vpop.xlane.xlu0 %633
        %v635 = vsel %vm371, %v589, 0.0
        %636 = vadd.xlane.f32.xlu0 %v635
        %v637 = vpop.xlane.xlu0 %636
        %v638 = vmul.f32 %v592, %v541
        %v639 = vmul.f32 %v595, %v541
        %v640 = vmul.f32 %v598, %v541
        %v641 = vmul.f32 %v601, %v541
        %v642 = vmul.f32 %v604, %v541
        %v643 = vmul.f32 %v607, %v541
        %v644 = vmul.f32 %v610, %v541
        %v645 = vmul.f32 %v613, %v541
        %v646 = vmul.f32 %v616, %v541
        %v647 = vmul.f32 %v619, %v541
        %v648 = vmul.f32 %v622, %v541
        %v649 = vmul.f32 %v625, %v541
        %v650 = vmul.f32 %v628, %v541
        %v651 = vmul.f32 %v631, %v541
        %v652 = vmul.f32 %v634, %v541
        %v653 = vmul.f32 %v637, %v541
        %v654 = vadd.f32 %v638, 1e-05
        %v655 = vadd.f32 %v639, 1e-05
        %v656 = vadd.f32 %v640, 1e-05
        %v657 = vadd.f32 %v641, 1e-05
        %v658 = vadd.f32 %v642, 1e-05
        %v659 = vadd.f32 %v643, 1e-05
        %v660 = vadd.f32 %v644, 1e-05
        %v661 = vadd.f32 %v645, 1e-05
        %v662 = vadd.f32 %v646, 1e-05
        %v663 = vadd.f32 %v647, 1e-05
        %v664 = vadd.f32 %v648, 1e-05
        %v665 = vadd.f32 %v649, 1e-05
        %v666 = vadd.f32 %v650, 1e-05
        %v667 = vadd.f32 %v651, 1e-05
        %v668 = vadd.f32 %v652, 1e-05
        %v669 = vadd.f32 %v653, 1e-05
        %v670 = vrsqrt.pop %v654
        %v671 = vrsqrt.pop %v655
        %v672 = vrsqrt.pop %v656
        %v673 = vrsqrt.pop %v657
        %v674 = vrsqrt.pop %v658
        %v675 = vrsqrt.pop %v659
        %v676 = vrsqrt.pop %v660
        %v677 = vrsqrt.pop %v661
        %v678 = vrsqrt.pop %v662
        %v679 = vrsqrt.pop %v663
        %v680 = vrsqrt.pop %v664
        %v681 = vrsqrt.pop %v665
        %v682 = vrsqrt.pop %v666
        %v683 = vrsqrt.pop %v667
        %v684 = vrsqrt.pop %v668
        %v685 = vrsqrt.pop %v669
        %v686 = vmul.f32 %v558, %v670
        %v687 = vmul.f32 %v559, %v671
        %v688 = vmul.f32 %v560, %v672
        %v689 = vmul.f32 %v561, %v673
        %v690 = vmul.f32 %v562, %v674
        %v691 = vmul.f32 %v563, %v675
        %v692 = vmul.f32 %v564, %v676
        %v693 = vmul.f32 %v565, %v677
        %v694 = vmul.f32 %v566, %v678
        %v695 = vmul.f32 %v567, %v679
        %v696 = vmul.f32 %v568, %v680
        %v697 = vmul.f32 %v569, %v681
        %v698 = vmul.f32 %v570, %v682
        %v699 = vmul.f32 %v571, %v683
        %v700 = vmul.f32 %v572, %v684
        %v701 = vmul.f32 %v573, %v685
        %v702 = vlaneseq
        %v703 = vshrl.u32 %v702, 7
        %v704 = vsub.s32 1, %v703
        %v705 = vrot.slane %v318, %v704
        %v706 = vmul.f32 %v686, %v705
        %v707 = vmul.f32 %v687, %v705
        %v708 = vmul.f32 %v688, %v705
        %v709 = vmul.f32 %v689, %v705
        %v710 = vmul.f32 %v690, %v705
        %v711 = vmul.f32 %v691, %v705
        %v712 = vmul.f32 %v692, %v705
        %v713 = vmul.f32 %v693, %v705
        %v714 = vmul.f32 %v694, %v705
        %v715 = vmul.f32 %v695, %v705
        %v716 = vmul.f32 %v696, %v705
        %v717 = vmul.f32 %v697, %v705
        %v718 = vmul.f32 %v698, %v705
        %v719 = vmul.f32 %v699, %v705
        %v720 = vmul.f32 %v700, %v705
        %v721 = vmul.f32 %v701, %v705
        %v722 = vlaneseq
        %v723 = vshrl.u32 %v722, 7
        %v724 = vsub.s32 2, %v723
        %v725 = vrot.slane %v318, %v724
        %v726 = vadd.f32 %v706, %v725
        %v727 = vadd.f32 %v707, %v725
        %v728 = vadd.f32 %v708, %v725
        %v729 = vadd.f32 %v709, %v725
        %v730 = vadd.f32 %v710, %v725
        %v731 = vadd.f32 %v711, %v725
        %v732 = vadd.f32 %v712, %v725
        %v733 = vadd.f32 %v713, %v725
        %v734 = vadd.f32 %v714, %v725
        %v735 = vadd.f32 %v715, %v725
        %v736 = vadd.f32 %v716, %v725
        %v737 = vadd.f32 %v717, %v725
        %v738 = vadd.f32 %v718, %v725
        %v739 = vadd.f32 %v719, %v725
        %v740 = vadd.f32 %v720, %v725
        %v741 = vadd.f32 %v721, %v725
        %v742 = vpack.c.bf16 %v727, %v726
        %v743 = vpack.c.bf16 %v729, %v728
        %v744 = vpack.c.bf16 %v731, %v730
        %v745 = vpack.c.bf16 %v733, %v732
        %v746 = vpack.c.bf16 %v735, %v734
        %v747 = vpack.c.bf16 %v737, %v736
        %v748 = vpack.c.bf16 %v739, %v738
        %v749 = vpack.c.bf16 %v741, %v740
        %v758 = vunpack.c.l.b16 %v262
        %v759 = vunpack.c.h.b16 %v262
        %v760 = vunpack.c.l.b16 %v263
        %v761 = vunpack.c.h.b16 %v263
        %v762 = vunpack.c.l.b16 %v264
        %v763 = vunpack.c.h.b16 %v264
        %v764 = vunpack.c.l.b16 %v265
        %v765 = vunpack.c.h.b16 %v265
        %v766 = vunpack.c.l.b16 %v266
        %v767 = vunpack.c.h.b16 %v266
        %v768 = vunpack.c.l.b16 %v267
        %v769 = vunpack.c.h.b16 %v267
        %v770 = vunpack.c.l.b16 %v268
        %v771 = vunpack.c.h.b16 %v268
        %v772 = vunpack.c.l.b16 %v269
        %v773 = vunpack.c.h.b16 %v269
        %v774 = vpack.c.b16 %v760, %v758
        %v775 = vpack.c.b16 %v761, %v759
        %v776 = vpack.c.b16 %v764, %v762
        %v777 = vpack.c.b16 %v765, %v763
        %v778 = vpack.c.b16 %v768, %v766
        %v779 = vpack.c.b16 %v769, %v767
        %v780 = vpack.c.b16 %v772, %v770
        %v781 = vpack.c.b16 %v773, %v771
        %v791 = vsel %vm371, %v742, 0
        %v794 = vsel %vm371, %v743, 0
        %v797 = vsel %vm371, %v744, 0
        %v800 = vsel %vm371, %v745, 0
        %v803 = vsel %vm371, %v746, 0
        %v806 = vsel %vm371, %v747, 0
        %v809 = vsel %vm371, %v748, 0
        %v812 = vsel %vm371, %v749, 0
        %814 = vmatprep.subr.bf16.mxu0 0
        %815 = vmatpush1.bf16.msra.mxu0 0
        %816 = vmatprep.subr.bf16.mxu0 0
        %817 = vmatpush1.bf16.msra.mxu0 0
        %818 = vmatprep.subr.bf16.mxu0 0
        %819 = vmatpush1.bf16.msra.mxu0 0
        %820 = vmatprep.subr.bf16.mxu0 0
        %821 = vmatpush1.bf16.msra.mxu0 0
        %822 = vmatprep.subr.bf16.mxu0 %v781
        %823 = vmatpush1.bf16.msra.mxu0 %v780
        %824 = vmatprep.subr.bf16.mxu0 %v779
        %825 = vmatpush1.bf16.msra.mxu0 %v778
        %826 = vmatprep.subr.bf16.mxu0 %v777
        %827 = vmatpush1.bf16.msra.mxu0 %v776
        %828 = vmatprep.subr.bf16.mxu0 %v775
        %829 = vmatpush1.bf16.msra.mxu0 %v774
        %830 = vmatprep.subr.bf16.mxu0 0
        %831 = vmatpush2.bf16.msra.mxu0 0
        %832 = vmatprep.subr.bf16.mxu0 0
        %833 = vmatpush2.bf16.msra.mxu0 0
        %834 = vmatprep.subr.bf16.mxu0 0
        %835 = vmatpush2.bf16.msra.mxu0 0
        %836 = vmatprep.subr.bf16.mxu0 0
        %837 = vmatpush2.bf16.msra.mxu0 0
        %838 = vmatprep.subr.bf16.mxu0 0
        %839 = vmatpush2.bf16.msra.mxu0 0
        %840 = vmatprep.subr.bf16.mxu0 0
        %841 = vmatpush2.bf16.msra.mxu0 0
        %842 = vmatprep.subr.bf16.mxu0 0
        %843 = vmatpush2.bf16.msra.mxu0 0
        %844 = vmatprep.subr.bf16.mxu0 0
        %845 = vmatpush2.bf16.msra.mxu0 0
        %846 = vmatprep.mubr.bf16.mxu0 0
        %847 = vmatmul.mubr.bf16.gmra.mxu0 %v791
        %v848 = vpop.f32.mrf.mxu0
        %v849 = vadd.f32 0.0, %v848
        %v850 = vpop.f32.mrf.mxu0
        %v851 = vadd.f32 0.0, %v850
        %v852 = vpop.f32.mrf.mxu0
        %v853 = vadd.f32 0.0, %v852
        %v854 = vpop.f32.mrf.mxu0
        %v855 = vadd.f32 0.0, %v854
        %856 = vmatprep.mubr.bf16.mxu0 0
        %857 = vmatmul.mubr.bf16.gmra.mxu0 %v794
        %v858 = vpop.f32.mrf.mxu0
        %v859 = vadd.f32 0.0, %v858
        %v860 = vpop.f32.mrf.mxu0
        %v861 = vadd.f32 0.0, %v860
        %v862 = vpop.f32.mrf.mxu0
        %v863 = vadd.f32 0.0, %v862
        %v864 = vpop.f32.mrf.mxu0
        %v865 = vadd.f32 0.0, %v864
        %866 = vmatprep.mubr.bf16.mxu0 0
        %867 = vmatmul.mubr.bf16.gmra.mxu0 %v797
        %v868 = vpop.f32.mrf.mxu0
        %v869 = vadd.f32 0.0, %v868
        %v870 = vpop.f32.mrf.mxu0
        %v871 = vadd.f32 0.0, %v870
        %v872 = vpop.f32.mrf.mxu0
        %v873 = vadd.f32 0.0, %v872
        %v874 = vpop.f32.mrf.mxu0
        %v875 = vadd.f32 0.0, %v874
        %876 = vmatprep.mubr.bf16.mxu0 0
        %877 = vmatmul.mubr.bf16.gmra.mxu0 %v800
        %v878 = vpop.f32.mrf.mxu0
        %v879 = vadd.f32 0.0, %v878
        %v880 = vpop.f32.mrf.mxu0
        %v881 = vadd.f32 0.0, %v880
        %v882 = vpop.f32.mrf.mxu0
        %v883 = vadd.f32 0.0, %v882
        %v884 = vpop.f32.mrf.mxu0
        %v885 = vadd.f32 0.0, %v884
        %886 = vmatprep.mubr.bf16.mxu0 0
        %887 = vmatmul.mubr.bf16.gmra.mxu0 %v803
        %v888 = vpop.f32.mrf.mxu0
        %v889 = vadd.f32 0.0, %v888
        %v890 = vpop.f32.mrf.mxu0
        %v891 = vadd.f32 0.0, %v890
        %v892 = vpop.f32.mrf.mxu0
        %v893 = vadd.f32 0.0, %v892
        %v894 = vpop.f32.mrf.mxu0
        %v895 = vadd.f32 0.0, %v894
        %896 = vmatprep.mubr.bf16.mxu0 0
        %897 = vmatmul.mubr.bf16.gmra.mxu0 %v806
        %v898 = vpop.f32.mrf.mxu0
        %v899 = vadd.f32 0.0, %v898
        %v900 = vpop.f32.mrf.mxu0
        %v901 = vadd.f32 0.0, %v900
        %v902 = vpop.f32.mrf.mxu0
        %v903 = vadd.f32 0.0, %v902
        %v904 = vpop.f32.mrf.mxu0
        %v905 = vadd.f32 0.0, %v904
        %906 = vmatprep.mubr.bf16.mxu0 0
        %907 = vmatmul.mubr.bf16.gmra.mxu0 %v809
        %v908 = vpop.f32.mrf.mxu0
        %v909 = vadd.f32 0.0, %v908
        %v910 = vpop.f32.mrf.mxu0
        %v911 = vadd.f32 0.0, %v910
        %v912 = vpop.f32.mrf.mxu0
        %v913 = vadd.f32 0.0, %v912
        %v914 = vpop.f32.mrf.mxu0
        %v915 = vadd.f32 0.0, %v914
        %916 = vmatprep.mubr.bf16.mxu0 0
        %917 = vmatmul.mubr.bf16.gmra.mxu0 %v812
        %v918 = vpop.f32.mrf.mxu0
        %v919 = vadd.f32 0.0, %v918
        %v920 = vpop.f32.mrf.mxu0
        %v921 = vadd.f32 0.0, %v920
        %v922 = vpop.f32.mrf.mxu0
        %v923 = vadd.f32 0.0, %v922
        %v924 = vpop.f32.mrf.mxu0
        %v925 = vadd.f32 0.0, %v924
        %926 = vdwg.mxu0
        %vm927 = vcmp.gt.f32.partialorder %v849, 0.0
        %vm928 = vcmp.gt.f32.partialorder %v853, 0.0
        %vm929 = vcmp.gt.f32.partialorder %v859, 0.0
        %vm930 = vcmp.gt.f32.partialorder %v863, 0.0
        %vm931 = vcmp.gt.f32.partialorder %v869, 0.0
        %vm932 = vcmp.gt.f32.partialorder %v873, 0.0
        %vm933 = vcmp.gt.f32.partialorder %v879, 0.0
        %vm934 = vcmp.gt.f32.partialorder %v883, 0.0
        %vm935 = vcmp.gt.f32.partialorder %v889, 0.0
        %vm936 = vcmp.gt.f32.partialorder %v893, 0.0
        %vm937 = vcmp.gt.f32.partialorder %v899, 0.0
        %vm938 = vcmp.gt.f32.partialorder %v903, 0.0
        %vm939 = vcmp.gt.f32.partialorder %v909, 0.0
        %vm940 = vcmp.gt.f32.partialorder %v913, 0.0
        %vm941 = vcmp.gt.f32.partialorder %v919, 0.0
        %vm942 = vcmp.gt.f32.partialorder %v923, 0.0
        %v943 = vadd.f32 %v849, 1.0
        %v944 = vadd.f32 %v853, 1.0
        %v945 = vadd.f32 %v859, 1.0
        %v946 = vadd.f32 %v863, 1.0
        %v947 = vadd.f32 %v869, 1.0
        %v948 = vadd.f32 %v873, 1.0
        %v949 = vadd.f32 %v879, 1.0
        %v950 = vadd.f32 %v883, 1.0
        %v951 = vadd.f32 %v889, 1.0
        %v952 = vadd.f32 %v893, 1.0
        %v953 = vadd.f32 %v899, 1.0
        %v954 = vadd.f32 %v903, 1.0
        %v955 = vadd.f32 %v909, 1.0
        %v956 = vadd.f32 %v913, 1.0
        %v957 = vadd.f32 %v919, 1.0
        %v958 = vadd.f32 %v923, 1.0
        %v959 = vmin.f32 %v849, 0.0
        %v960 = vmin.f32 %v853, 0.0
        %v961 = vmin.f32 %v859, 0.0
        %v962 = vmin.f32 %v863, 0.0
        %v963 = vmin.f32 %v869, 0.0
        %v964 = vmin.f32 %v873, 0.0
        %v965 = vmin.f32 %v879, 0.0
        %v966 = vmin.f32 %v883, 0.0
        %v967 = vmin.f32 %v889, 0.0
        %v968 = vmin.f32 %v893, 0.0
        %v969 = vmin.f32 %v899, 0.0
        %v970 = vmin.f32 %v903, 0.0
        %v971 = vmin.f32 %v909, 0.0
        %v972 = vmin.f32 %v913, 0.0
        %v973 = vmin.f32 %v919, 0.0
        %v974 = vmin.f32 %v923, 0.0
        %v975 = vmul.f32 %v959, 1.442695
        %v976 = vpow.pop %v975
        %v977 = vmul.f32 %v960, 1.442695
        %v978 = vpow.pop %v977
        %v979 = vmul.f32 %v961, 1.442695
        %v980 = vpow.pop %v979
        %v981 = vmul.f32 %v962, 1.442695
        %v982 = vpow.pop %v981
        %v983 = vmul.f32 %v963, 1.442695
        %v984 = vpow.pop %v983
        %v985 = vmul.f32 %v964, 1.442695
        %v986 = vpow.pop %v985
        %v987 = vmul.f32 %v965, 1.442695
        %v988 = vpow.pop %v987
        %v989 = vmul.f32 %v966, 1.442695
        %v990 = vpow.pop %v989
        %v991 = vmul.f32 %v967, 1.442695
        %v992 = vpow.pop %v991
        %v993 = vmul.f32 %v968, 1.442695
        %v994 = vpow.pop %v993
        %v995 = vmul.f32 %v969, 1.442695
        %v996 = vpow.pop %v995
        %v997 = vmul.f32 %v970, 1.442695
        %v998 = vpow.pop %v997
        %v999 = vmul.f32 %v971, 1.442695
        %v1000 = vpow.pop %v999
        %v1001 = vmul.f32 %v972, 1.442695
        %v1002 = vpow.pop %v1001
        %v1003 = vmul.f32 %v973, 1.442695
        %v1004 = vpow.pop %v1003
        %v1005 = vmul.f32 %v974, 1.442695
        %v1006 = vpow.pop %v1005
        %v1007 = vsel %vm927, %v943, %v976
        %v1008 = vsel %vm928, %v944, %v978
        %v1009 = vsel %vm929, %v945, %v980
        %v1010 = vsel %vm930, %v946, %v982
        %v1011 = vsel %vm931, %v947, %v984
        %v1012 = vsel %vm932, %v948, %v986
        %v1013 = vsel %vm933, %v949, %v988
        %v1014 = vsel %vm934, %v950, %v990
        %v1015 = vsel %vm935, %v951, %v992
        %v1016 = vsel %vm936, %v952, %v994
        %v1017 = vsel %vm937, %v953, %v996
        %v1018 = vsel %vm938, %v954, %v998
        %v1019 = vsel %vm939, %v955, %v1000
        %v1020 = vsel %vm940, %v956, %v1002
        %v1021 = vsel %vm941, %v957, %v1004
        %v1022 = vsel %vm942, %v958, %v1006
        %v1023 = vlaneseq
        %v1024 = vshrl.u32 %v1023, 7
        %v1025 = vadd.s32 %v1024, 8
        %v1026 = vadd.s32 %v1024, 16
        %v1027 = vadd.s32 %v1024, 24
        %v1028 = vadd.s32 %v1024, 32
        %v1029 = vadd.s32 %v1024, 40
        %v1030 = vadd.s32 %v1024, 48
        %v1031 = vadd.s32 %v1024, 56
        %v1032 = vlaneseq
        %v1033 = vand.u32 %v1032, 127
        %v1034 = vshra.s32 %v1024, 5
        %v1035 = vshra.s32 %v1025, 5
        %v1036 = vshra.s32 %v1026, 5
        %v1037 = vshra.s32 %v1027, 5
        %v1038 = vshra.s32 %v1028, 5
        %v1039 = vshra.s32 %v1029, 5
        %v1040 = vshra.s32 %v1030, 5
        %v1041 = vshra.s32 %v1031, 5
        %v1042 = vshra.s32 %v1033, 5
        %v1043 = vand.u32 %v1042, 1
        %vm1044 = vcmp.eq.s32.totalorder %v1034, %v1043
        %vm1045 = vcmp.eq.s32.totalorder %v1035, %v1043
        %vm1046 = vcmp.eq.s32.totalorder %v1036, %v1043
        %vm1047 = vcmp.eq.s32.totalorder %v1037, %v1043
        %vm1048 = vcmp.eq.s32.totalorder %v1038, %v1043
        %vm1049 = vcmp.eq.s32.totalorder %v1039, %v1043
        %vm1050 = vcmp.eq.s32.totalorder %v1040, %v1043
        %vm1051 = vcmp.eq.s32.totalorder %v1041, %v1043
        %v1052 = vsel %vm1044, 1.0, 0.0
        %v1053 = vsel %vm1045, 1.0, 0.0
        %v1054 = vsel %vm1046, 1.0, 0.0
        %v1055 = vsel %vm1047, 1.0, 0.0
        %v1056 = vsel %vm1048, 1.0, 0.0
        %v1057 = vsel %vm1049, 1.0, 0.0
        %v1058 = vsel %vm1050, 1.0, 0.0
        %v1059 = vsel %vm1051, 1.0, 0.0
        %v1060 = vpack.c.bf16 %v1008, %v1007
        %v1061 = vpack.c.bf16 %v1010, %v1009
        %v1062 = vpack.c.bf16 %v1012, %v1011
        %v1063 = vpack.c.bf16 %v1014, %v1013
        %v1064 = vpack.c.bf16 %v1016, %v1015
        %v1065 = vpack.c.bf16 %v1018, %v1017
        %v1066 = vpack.c.bf16 %v1020, %v1019
        %v1067 = vpack.c.bf16 %v1022, %v1021
        %v1068 = vmul.f32 %v851, 0.015625
        %v1069 = vmul.f32 %v855, 0.015625
        %v1070 = vmul.f32 %v861, 0.015625
        %v1071 = vmul.f32 %v865, 0.015625
        %v1072 = vmul.f32 %v871, 0.015625
        %v1073 = vmul.f32 %v875, 0.015625
        %v1074 = vmul.f32 %v881, 0.015625
        %v1075 = vmul.f32 %v885, 0.015625
        %v1076 = vmul.f32 %v891, 0.015625
        %v1077 = vmul.f32 %v895, 0.015625
        %v1078 = vmul.f32 %v901, 0.015625
        %v1079 = vmul.f32 %v905, 0.015625
        %v1080 = vmul.f32 %v911, 0.015625
        %v1081 = vmul.f32 %v915, 0.015625
        %v1082 = vmul.f32 %v921, 0.015625
        %v1083 = vmul.f32 %v925, 0.015625
        %v1084 = vsel %vm371, %v1068, 1.0
        %v1085 = vsel %vm371, %v1069, 1.0
        %v1086 = vsel %vm371, %v1070, 1.0
        %v1087 = vsel %vm371, %v1071, 1.0
        %v1088 = vsel %vm371, %v1072, 1.0
        %v1089 = vsel %vm371, %v1073, 1.0
        %v1090 = vsel %vm371, %v1074, 1.0
        %v1091 = vsel %vm371, %v1075, 1.0
        %v1092 = vsel %vm371, %v1076, 1.0
        %v1093 = vsel %vm371, %v1077, 1.0
        %v1094 = vsel %vm371, %v1078, 1.0
        %v1095 = vsel %vm371, %v1079, 1.0
        %v1096 = vsel %vm371, %v1080, 1.0
        %v1097 = vsel %vm371, %v1081, 1.0
        %v1098 = vsel %vm371, %v1082, 1.0
        %v1099 = vsel %vm371, %v1083, 1.0
        %v1100 = vpack.c.bf16 %v1085, %v1084
        %v1101 = vpack.c.bf16 %v1087, %v1086
        %v1102 = vpack.c.bf16 %v1089, %v1088
        %v1103 = vpack.c.bf16 %v1091, %v1090
        %v1104 = vpack.c.bf16 %v1093, %v1092
        %v1105 = vpack.c.bf16 %v1095, %v1094
        %v1106 = vpack.c.bf16 %v1097, %v1096
        %v1107 = vpack.c.bf16 %v1099, %v1098
        %1112 = vrot.lane.b32.xlu0 %v1060, 64
        %v1113 = vpop.permute.xlu0 %1112
        %1114 = vrot.lane.b32.xlu0 %v1061, 64
        %v1115 = vpop.permute.xlu0 %1114
        %1116 = vrot.lane.b32.xlu0 %v1062, 64
        %v1117 = vpop.permute.xlu0 %1116
        %1118 = vrot.lane.b32.xlu0 %v1063, 64
        %v1119 = vpop.permute.xlu0 %1118
        %1124 = vxpose.xlu0.c.b16.start [1/8] %v1113, 128
        %1125 = vxpose.xlu0.c.b16.cont [2/8] %v1115, 128
        %1126 = vxpose.xlu0.c.b16.cont [3/8] %v1117, 128
        %1127 = vxpose.xlu0.c.b16.cont [4/8] %v1119, 128
        %1128 = vxpose.xlu0.c.b16.cont [5/8] 0, 128
        %1129 = vxpose.xlu0.c.b16.cont [6/8] 0, 128
        %1130 = vxpose.xlu0.c.b16.cont [7/8] 0, 128
        %1131 = vxpose.xlu0.c.b16.end [8/8] 0, 128
        %v1132 = vpop.trf.xlu0
        %v1133 = vpop.trf.xlu0
        %v1134 = vpop.trf.xlu0
        %v1135 = vpop.trf.xlu0
        %v1136 = vpop.trf.xlu0
        %v1137 = vpop.trf.xlu0
        %v1138 = vpop.trf.xlu0
        %v1139 = vpop.trf.xlu0
        %v1141 = vsel %vm371, %v1132, 0
        %v1144 = vsel %vm371, %v1133, 0
        %v1147 = vsel %vm371, %v1134, 0
        %v1150 = vsel %vm371, %v1135, 0
        %1152 = vmatprep.subr.bf16.mxu0 0
        %1153 = vmatpush1.bf16.msra.mxu0 0
        %1154 = vmatprep.subr.bf16.mxu0 0
        %1155 = vmatpush1.bf16.msra.mxu0 0
        %1156 = vmatprep.subr.bf16.mxu0 0
        %1157 = vmatpush1.bf16.msra.mxu0 0
        %1158 = vmatprep.subr.bf16.mxu0 0
        %1159 = vmatpush1.bf16.msra.mxu0 0
        %1160 = vmatprep.subr.bf16.mxu0 0
        %1161 = vmatpush1.bf16.msra.mxu0 %v1103
        %1162 = vmatprep.subr.bf16.mxu0 0
        %1163 = vmatpush1.bf16.msra.mxu0 %v1102
        %1164 = vmatprep.subr.bf16.mxu0 0
        %1165 = vmatpush1.bf16.msra.mxu0 %v1101
        %1166 = vmatprep.subr.bf16.mxu0 0
        %1167 = vmatpush1.bf16.msra.mxu0 %v1100
        %1168 = vmatprep.subr.bf16.mxu0 0
        %1169 = vmatpush2.bf16.msra.mxu0 0
        %1170 = vmatprep.subr.bf16.mxu0 0
        %1171 = vmatpush2.bf16.msra.mxu0 0
        %1172 = vmatprep.subr.bf16.mxu0 0
        %1173 = vmatpush2.bf16.msra.mxu0 0
        %1174 = vmatprep.subr.bf16.mxu0 0
        %1175 = vmatpush2.bf16.msra.mxu0 0
        %1176 = vmatprep.subr.bf16.mxu0 0
        %1177 = vmatpush2.bf16.msra.mxu0 0
        %1178 = vmatprep.subr.bf16.mxu0 0
        %1179 = vmatpush2.bf16.msra.mxu0 0
        %1180 = vmatprep.subr.bf16.mxu0 0
        %1181 = vmatpush2.bf16.msra.mxu0 0
        %1182 = vmatprep.subr.bf16.mxu0 0
        %1183 = vmatpush2.bf16.msra.mxu0 0
        %1184 = vmatprep.mubr.bf16.mxu0 0
        %1185 = vmatmul.mubr.bf16.gmra.mxu0 %v1141
        %v1186 = vpop.f32.mrf.mxu0
        %v1187 = vadd.f32 0.0, %v1186
        %v1188 = vpop.f32.mrf.mxu0
        %v1189 = vpop.f32.mrf.mxu0
        %v1190 = vadd.f32 0.0, %v1189
        %v1191 = vpop.f32.mrf.mxu0
        %1192 = vmatprep.mubr.bf16.mxu0 0
        %1193 = vmatmul.mubr.bf16.gmra.mxu0 %v1144
        %v1194 = vpop.f32.mrf.mxu0
        %v1195 = vadd.f32 0.0, %v1194
        %v1196 = vpop.f32.mrf.mxu0
        %v1197 = vpop.f32.mrf.mxu0
        %v1198 = vadd.f32 0.0, %v1197
        %v1199 = vpop.f32.mrf.mxu0
        %1200 = vmatprep.mubr.bf16.mxu0 0
        %1201 = vmatmul.mubr.bf16.gmra.mxu0 %v1147
        %v1202 = vpop.f32.mrf.mxu0
        %v1203 = vadd.f32 0.0, %v1202
        %v1204 = vpop.f32.mrf.mxu0
        %v1205 = vpop.f32.mrf.mxu0
        %v1206 = vadd.f32 0.0, %v1205
        %v1207 = vpop.f32.mrf.mxu0
        %1208 = vmatprep.mubr.bf16.mxu0 0
        %1209 = vmatmul.mubr.bf16.gmra.mxu0 %v1150
        %v1210 = vpop.f32.mrf.mxu0
        %v1211 = vadd.f32 0.0, %v1210
        %v1212 = vpop.f32.mrf.mxu0
        %v1213 = vpop.f32.mrf.mxu0
        %v1214 = vadd.f32 0.0, %v1213
        %v1215 = vpop.f32.mrf.mxu0
        %1216 = vdwg.mxu0
        %v1217 = vmul.f32 %v1187, %v1052
        %v1218 = vmul.f32 %v1190, %v1053
        %v1219 = vmul.f32 %v1195, %v1054
        %v1220 = vmul.f32 %v1198, %v1055
        %v1221 = vmul.f32 %v1203, %v1056
        %v1222 = vmul.f32 %v1206, %v1057
        %v1223 = vmul.f32 %v1211, %v1058
        %v1224 = vmul.f32 %v1214, %v1059
        %v1225 = vpack.c.bf16 %v1218, %v1217
        %v1226 = vpack.c.bf16 %v1220, %v1219
        %v1227 = vpack.c.bf16 %v1222, %v1221
        %v1228 = vpack.c.bf16 %v1224, %v1223
        %v1230 = vsel %vm371, %v1060, 0
        %v1233 = vsel %vm371, %v1061, 0
        %v1236 = vsel %vm371, %v1062, 0
        %v1239 = vsel %vm371, %v1063, 0
        %1241 = vmatprep.subr.bf16.mxu0 0
        %1242 = vmatpush1.bf16.msra.mxu0 0
        %1243 = vmatprep.subr.bf16.mxu0 0
        %1244 = vmatpush1.bf16.msra.mxu0 0
        %1245 = vmatprep.subr.bf16.mxu0 0
        %1246 = vmatpush1.bf16.msra.mxu0 0
        %1247 = vmatprep.subr.bf16.mxu0 0
        %1248 = vmatpush1.bf16.msra.mxu0 0
        %1249 = vmatprep.subr.bf16.mxu0 0
        %1250 = vmatpush1.bf16.msra.mxu0 %v1228
        %1251 = vmatprep.subr.bf16.mxu0 0
        %1252 = vmatpush1.bf16.msra.mxu0 %v1227
        %1253 = vmatprep.subr.bf16.mxu0 0
        %1254 = vmatpush1.bf16.msra.mxu0 %v1226
        %1255 = vmatprep.subr.bf16.mxu0 0
        %1256 = vmatpush1.bf16.msra.mxu0 %v1225
        %1257 = vmatprep.subr.bf16.mxu0 0
        %1258 = vmatpush2.bf16.msra.mxu0 0
        %1259 = vmatprep.subr.bf16.mxu0 0
        %1260 = vmatpush2.bf16.msra.mxu0 0
        %1261 = vmatprep.subr.bf16.mxu0 0
        %1262 = vmatpush2.bf16.msra.mxu0 0
        %1263 = vmatprep.subr.bf16.mxu0 0
        %1264 = vmatpush2.bf16.msra.mxu0 0
        %1265 = vmatprep.subr.bf16.mxu0 0
        %1266 = vmatpush2.bf16.msra.mxu0 0
        %1267 = vmatprep.subr.bf16.mxu0 0
        %1268 = vmatpush2.bf16.msra.mxu0 0
        %1269 = vmatprep.subr.bf16.mxu0 0
        %1270 = vmatpush2.bf16.msra.mxu0 0
        %1271 = vmatprep.subr.bf16.mxu0 0
        %1272 = vmatpush2.bf16.msra.mxu0 0
        %1273 = vmatprep.mubr.bf16.mxu0 0
        %1274 = vmatmul.mubr.bf16.gmra.mxu0 %v1230
        %v1275 = vpop.f32.mrf.mxu0
        %v1276 = vadd.f32 0.0, %v1275
        %v1277 = vpop.f32.mrf.mxu0
        %v1278 = vpop.f32.mrf.mxu0
        %v1279 = vadd.f32 0.0, %v1278
        %v1280 = vpop.f32.mrf.mxu0
        %1281 = vmatprep.mubr.bf16.mxu0 0
        %1282 = vmatmul.mubr.bf16.gmra.mxu0 %v1233
        %v1283 = vpop.f32.mrf.mxu0
        %v1284 = vadd.f32 0.0, %v1283
        %v1285 = vpop.f32.mrf.mxu0
        %v1286 = vpop.f32.mrf.mxu0
        %v1287 = vadd.f32 0.0, %v1286
        %v1288 = vpop.f32.mrf.mxu0
        %1289 = vmatprep.mubr.bf16.mxu0 0
        %1290 = vmatmul.mubr.bf16.gmra.mxu0 %v1236
        %v1291 = vpop.f32.mrf.mxu0
        %v1292 = vadd.f32 0.0, %v1291
        %v1293 = vpop.f32.mrf.mxu0
        %v1294 = vpop.f32.mrf.mxu0
        %v1295 = vadd.f32 0.0, %v1294
        %v1296 = vpop.f32.mrf.mxu0
        %1297 = vmatprep.mubr.bf16.mxu0 0
        %1298 = vmatmul.mubr.bf16.gmra.mxu0 %v1239
        %v1299 = vpop.f32.mrf.mxu0
        %v1300 = vadd.f32 0.0, %v1299
        %v1301 = vpop.f32.mrf.mxu0
        %v1302 = vpop.f32.mrf.mxu0
        %v1303 = vadd.f32 0.0, %v1302
        %v1304 = vpop.f32.mrf.mxu0
        %1305 = vdwg.mxu0
        %v1306 = vadd.f32 %v1276, 1e-06
        %v1307 = vadd.f32 %v1279, 1e-06
        %v1308 = vadd.f32 %v1284, 1e-06
        %v1309 = vadd.f32 %v1287, 1e-06
        %v1310 = vadd.f32 %v1292, 1e-06
        %v1311 = vadd.f32 %v1295, 1e-06
        %v1312 = vadd.f32 %v1300, 1e-06
        %v1313 = vadd.f32 %v1303, 1e-06
        %v1314 = vrcp.pop %v1306
        %v1315 = vrcp.pop %v1307
        %v1316 = vrcp.pop %v1308
        %v1317 = vrcp.pop %v1309
        %v1318 = vrcp.pop %v1310
        %v1319 = vrcp.pop %v1311
        %v1320 = vrcp.pop %v1312
        %v1321 = vrcp.pop %v1313
        %1330 = vrot.lane.b32.xlu0 %v1314, 64
        %v1331 = vpop.permute.xlu0 %1330
        %1332 = vrot.lane.b32.xlu0 %v1315, 64
        %v1333 = vpop.permute.xlu0 %1332
        %1334 = vrot.lane.b32.xlu0 %v1316, 64
        %v1335 = vpop.permute.xlu0 %1334
        %1336 = vrot.lane.b32.xlu0 %v1317, 64
        %v1337 = vpop.permute.xlu0 %1336
        %1338 = vrot.lane.b32.xlu0 %v1318, 64
        %v1339 = vpop.permute.xlu0 %1338
        %1340 = vrot.lane.b32.xlu0 %v1319, 64
        %v1341 = vpop.permute.xlu0 %1340
        %1342 = vrot.lane.b32.xlu0 %v1320, 64
        %v1343 = vpop.permute.xlu0 %1342
        %1344 = vrot.lane.b32.xlu0 %v1321, 64
        %v1345 = vpop.permute.xlu0 %1344
        %v1354 = vmul.f32 %v1276, %v1331
        %v1355 = vmul.f32 %v1279, %v1333
        %v1356 = vmul.f32 %v1284, %v1335
        %v1357 = vmul.f32 %v1287, %v1337
        %v1358 = vmul.f32 %v1292, %v1339
        %v1359 = vmul.f32 %v1295, %v1341
        %v1360 = vmul.f32 %v1300, %v1343
        %v1361 = vmul.f32 %v1303, %v1345
        %v1362 = vmul.f32 %v1354, 64.0
        %v1363 = vmul.f32 %v1355, 64.0
        %v1364 = vmul.f32 %v1356, 64.0
        %v1365 = vmul.f32 %v1357, 64.0
        %v1366 = vmul.f32 %v1358, 64.0
        %v1367 = vmul.f32 %v1359, 64.0
        %v1368 = vmul.f32 %v1360, 64.0
        %v1369 = vmul.f32 %v1361, 64.0
        %1370 = vst.msk [vmem:[#allocation2] sm:$0xff] %vm371, %v1362
        %1371 = vst.msk [vmem:[#allocation2 + $0x8] sm:$0xff] %vm371, %v1363
        %1372 = vst.msk [vmem:[#allocation2 + $0x10] sm:$0xff] %vm371, %v1364
        %1373 = vst.msk [vmem:[#allocation2 + $0x18] sm:$0xff] %vm371, %v1365
        %1374 = vst.msk [vmem:[#allocation2 + $0x20] sm:$0xff] %vm371, %v1366
        %1375 = vst.msk [vmem:[#allocation2 + $0x28] sm:$0xff] %vm371, %v1367
        %1376 = vst.msk [vmem:[#allocation2 + $0x30] sm:$0xff] %vm371, %v1368
        %1377 = vst.msk [vmem:[#allocation2 + $0x38] sm:$0xff] %vm371, %v1369
        %1382 = vrot.lane.b32.xlu0 %v1064, 64
        %v1383 = vpop.permute.xlu0 %1382
        %1384 = vrot.lane.b32.xlu0 %v1065, 64
        %v1385 = vpop.permute.xlu0 %1384
        %1386 = vrot.lane.b32.xlu0 %v1066, 64
        %v1387 = vpop.permute.xlu0 %1386
        %1388 = vrot.lane.b32.xlu0 %v1067, 64
        %v1389 = vpop.permute.xlu0 %1388
        %1394 = vxpose.xlu0.c.b16.start [1/8] %v1383, 128
        %1395 = vxpose.xlu0.c.b16.cont [2/8] %v1385, 128
        %1396 = vxpose.xlu0.c.b16.cont [3/8] %v1387, 128
        %1397 = vxpose.xlu0.c.b16.cont [4/8] %v1389, 128
        %1398 = vxpose.xlu0.c.b16.cont [5/8] 0, 128
        %1399 = vxpose.xlu0.c.b16.cont [6/8] 0, 128
        %1400 = vxpose.xlu0.c.b16.cont [7/8] 0, 128
        %1401 = vxpose.xlu0.c.b16.end [8/8] 0, 128
        %v1402 = vpop.trf.xlu0
        %v1403 = vpop.trf.xlu0
        %v1404 = vpop.trf.xlu0
        %v1405 = vpop.trf.xlu0
        %v1406 = vpop.trf.xlu0
        %v1407 = vpop.trf.xlu0
        %v1408 = vpop.trf.xlu0
        %v1409 = vpop.trf.xlu0
        %v1411 = vsel %vm371, %v1402, 0
        %v1414 = vsel %vm371, %v1403, 0
        %v1417 = vsel %vm371, %v1404, 0
        %v1420 = vsel %vm371, %v1405, 0
        %1422 = vmatprep.subr.bf16.mxu0 0
        %1423 = vmatpush1.bf16.msra.mxu0 0
        %1424 = vmatprep.subr.bf16.mxu0 0
        %1425 = vmatpush1.bf16.msra.mxu0 0
        %1426 = vmatprep.subr.bf16.mxu0 0
        %1427 = vmatpush1.bf16.msra.mxu0 0
        %1428 = vmatprep.subr.bf16.mxu0 0
        %1429 = vmatpush1.bf16.msra.mxu0 0
        %1430 = vmatprep.subr.bf16.mxu0 0
        %1431 = vmatpush1.bf16.msra.mxu0 %v1107
        %1432 = vmatprep.subr.bf16.mxu0 0
        %1433 = vmatpush1.bf16.msra.mxu0 %v1106
        %1434 = vmatprep.subr.bf16.mxu0 0
        %1435 = vmatpush1.bf16.msra.mxu0 %v1105
        %1436 = vmatprep.subr.bf16.mxu0 0
        %1437 = vmatpush1.bf16.msra.mxu0 %v1104
        %1438 = vmatprep.subr.bf16.mxu0 0
        %1439 = vmatpush2.bf16.msra.mxu0 0
        %1440 = vmatprep.subr.bf16.mxu0 0
        %1441 = vmatpush2.bf16.msra.mxu0 0
        %1442 = vmatprep.subr.bf16.mxu0 0
        %1443 = vmatpush2.bf16.msra.mxu0 0
        %1444 = vmatprep.subr.bf16.mxu0 0
        %1445 = vmatpush2.bf16.msra.mxu0 0
        %1446 = vmatprep.subr.bf16.mxu0 0
        %1447 = vmatpush2.bf16.msra.mxu0 0
        %1448 = vmatprep.subr.bf16.mxu0 0
        %1449 = vmatpush2.bf16.msra.mxu0 0
        %1450 = vmatprep.subr.bf16.mxu0 0
        %1451 = vmatpush2.bf16.msra.mxu0 0
        %1452 = vmatprep.subr.bf16.mxu0 0
        %1453 = vmatpush2.bf16.msra.mxu0 0
        %1454 = vmatprep.mubr.bf16.mxu0 0
        %1455 = vmatmul.mubr.bf16.gmra.mxu0 %v1411
        %v1456 = vpop.f32.mrf.mxu0
        %v1457 = vadd.f32 0.0, %v1456
        %v1458 = vpop.f32.mrf.mxu0
        %v1459 = vpop.f32.mrf.mxu0
        %v1460 = vadd.f32 0.0, %v1459
        %v1461 = vpop.f32.mrf.mxu0
        %1462 = vmatprep.mubr.bf16.mxu0 0
        %1463 = vmatmul.mubr.bf16.gmra.mxu0 %v1414
        %v1464 = vpop.f32.mrf.mxu0
        %v1465 = vadd.f32 0.0, %v1464
        %v1466 = vpop.f32.mrf.mxu0
        %v1467 = vpop.f32.mrf.mxu0
        %v1468 = vadd.f32 0.0, %v1467
        %v1469 = vpop.f32.mrf.mxu0
        %1470 = vmatprep.mubr.bf16.mxu0 0
        %1471 = vmatmul.mubr.bf16.gmra.mxu0 %v1417
        %v1472 = vpop.f32.mrf.mxu0
        %v1473 = vadd.f32 0.0, %v1472
        %v1474 = vpop.f32.mrf.mxu0
        %v1475 = vpop.f32.mrf.mxu0
        %v1476 = vadd.f32 0.0, %v1475
        %v1477 = vpop.f32.mrf.mxu0
        %1478 = vmatprep.mubr.bf16.mxu0 0
        %1479 = vmatmul.mubr.bf16.gmra.mxu0 %v1420
        %v1480 = vpop.f32.mrf.mxu0
        %v1481 = vadd.f32 0.0, %v1480
        %v1482 = vpop.f32.mrf.mxu0
        %v1483 = vpop.f32.mrf.mxu0
        %v1484 = vadd.f32 0.0, %v1483
        %v1485 = vpop.f32.mrf.mxu0
        %1486 = vdwg.mxu0
        %v1487 = vmul.f32 %v1457, %v1052
        %v1488 = vmul.f32 %v1460, %v1053
        %v1489 = vmul.f32 %v1465, %v1054
        %v1490 = vmul.f32 %v1468, %v1055
        %v1491 = vmul.f32 %v1473, %v1056
        %v1492 = vmul.f32 %v1476, %v1057
        %v1493 = vmul.f32 %v1481, %v1058
        %v1494 = vmul.f32 %v1484, %v1059
        %v1495 = vpack.c.bf16 %v1488, %v1487
        %v1496 = vpack.c.bf16 %v1490, %v1489
        %v1497 = vpack.c.bf16 %v1492, %v1491
        %v1498 = vpack.c.bf16 %v1494, %v1493
        %v1500 = vsel %vm371, %v1064, 0
        %v1503 = vsel %vm371, %v1065, 0
        %v1506 = vsel %vm371, %v1066, 0
        %v1509 = vsel %vm371, %v1067, 0
        %1511 = vmatprep.subr.bf16.mxu0 0
        %1512 = vmatpush1.bf16.msra.mxu0 0
        %1513 = vmatprep.subr.bf16.mxu0 0
        %1514 = vmatpush1.bf16.msra.mxu0 0
        %1515 = vmatprep.subr.bf16.mxu0 0
        %1516 = vmatpush1.bf16.msra.mxu0 0
        %1517 = vmatprep.subr.bf16.mxu0 0
        %1518 = vmatpush1.bf16.msra.mxu0 0
        %1519 = vmatprep.subr.bf16.mxu0 0
        %1520 = vmatpush1.bf16.msra.mxu0 %v1498
        %1521 = vmatprep.subr.bf16.mxu0 0
        %1522 = vmatpush1.bf16.msra.mxu0 %v1497
        %1523 = vmatprep.subr.bf16.mxu0 0
        %1524 = vmatpush1.bf16.msra.mxu0 %v1496
        %1525 = vmatprep.subr.bf16.mxu0 0
        %1526 = vmatpush1.bf16.msra.mxu0 %v1495
        %1527 = vmatprep.subr.bf16.mxu0 0
        %1528 = vmatpush2.bf16.msra.mxu0 0
        %1529 = vmatprep.subr.bf16.mxu0 0
        %1530 = vmatpush2.bf16.msra.mxu0 0
        %1531 = vmatprep.subr.bf16.mxu0 0
        %1532 = vmatpush2.bf16.msra.mxu0 0
        %1533 = vmatprep.subr.bf16.mxu0 0
        %1534 = vmatpush2.bf16.msra.mxu0 0
        %1535 = vmatprep.subr.bf16.mxu0 0
        %1536 = vmatpush2.bf16.msra.mxu0 0
        %1537 = vmatprep.subr.bf16.mxu0 0
        %1538 = vmatpush2.bf16.msra.mxu0 0
        %1539 = vmatprep.subr.bf16.mxu0 0
        %1540 = vmatpush2.bf16.msra.mxu0 0
        %1541 = vmatprep.subr.bf16.mxu0 0
        %1542 = vmatpush2.bf16.msra.mxu0 0
        %1543 = vmatprep.mubr.bf16.mxu0 0
        %1544 = vmatmul.mubr.bf16.gmra.mxu0 %v1500
        %v1545 = vpop.f32.mrf.mxu0
        %v1546 = vadd.f32 0.0, %v1545
        %v1547 = vpop.f32.mrf.mxu0
        %v1548 = vpop.f32.mrf.mxu0
        %v1549 = vadd.f32 0.0, %v1548
        %v1550 = vpop.f32.mrf.mxu0
        %1551 = vmatprep.mubr.bf16.mxu0 0
        %1552 = vmatmul.mubr.bf16.gmra.mxu0 %v1503
        %v1553 = vpop.f32.mrf.mxu0
        %v1554 = vadd.f32 0.0, %v1553
        %v1555 = vpop.f32.mrf.mxu0
        %v1556 = vpop.f32.mrf.mxu0
        %v1557 = vadd.f32 0.0, %v1556
        %v1558 = vpop.f32.mrf.mxu0
        %1559 = vmatprep.mubr.bf16.mxu0 0
        %1560 = vmatmul.mubr.bf16.gmra.mxu0 %v1506
        %v1561 = vpop.f32.mrf.mxu0
        %v1562 = vadd.f32 0.0, %v1561
        %v1563 = vpop.f32.mrf.mxu0
        %v1564 = vpop.f32.mrf.mxu0
        %v1565 = vadd.f32 0.0, %v1564
        %v1566 = vpop.f32.mrf.mxu0
        %1567 = vmatprep.mubr.bf16.mxu0 0
        %1568 = vmatmul.mubr.bf16.gmra.mxu0 %v1509
        %v1569 = vpop.f32.mrf.mxu0
        %v1570 = vadd.f32 0.0, %v1569
        %v1571 = vpop.f32.mrf.mxu0
        %v1572 = vpop.f32.mrf.mxu0
        %v1573 = vadd.f32 0.0, %v1572
        %v1574 = vpop.f32.mrf.mxu0
        %1575 = vdwg.mxu0
        %v1576 = vadd.f32 %v1546, 1e-06
        %v1577 = vadd.f32 %v1549, 1e-06
        %v1578 = vadd.f32 %v1554, 1e-06
        %v1579 = vadd.f32 %v1557, 1e-06
        %v1580 = vadd.f32 %v1562, 1e-06
        %v1581 = vadd.f32 %v1565, 1e-06
        %v1582 = vadd.f32 %v1570, 1e-06
        %v1583 = vadd.f32 %v1573, 1e-06
        %v1584 = vrcp.pop %v1576
        %v1585 = vrcp.pop %v1577
        %v1586 = vrcp.pop %v1578
        %v1587 = vrcp.pop %v1579
        %v1588 = vrcp.pop %v1580
        %v1589 = vrcp.pop %v1581
        %v1590 = vrcp.pop %v1582
        %v1591 = vrcp.pop %v1583
        %1600 = vrot.lane.b32.xlu0 %v1584, 64
        %v1601 = vpop.permute.xlu0 %1600
        %1602 = vrot.lane.b32.xlu0 %v1585, 64
        %v1603 = vpop.permute.xlu0 %1602
        %1604 = vrot.lane.b32.xlu0 %v1586, 64
        %v1605 = vpop.permute.xlu0 %1604
        %1606 = vrot.lane.b32.xlu0 %v1587, 64
        %v1607 = vpop.permute.xlu0 %1606
        %1608 = vrot.lane.b32.xlu0 %v1588, 64
        %v1609 = vpop.permute.xlu0 %1608
        %1610 = vrot.lane.b32.xlu0 %v1589, 64
        %v1611 = vpop.permute.xlu0 %1610
        %1612 = vrot.lane.b32.xlu0 %v1590, 64
        %v1613 = vpop.permute.xlu0 %1612
        %1614 = vrot.lane.b32.xlu0 %v1591, 64
        %v1615 = vpop.permute.xlu0 %1614
        %v1624 = vmul.f32 %v1546, %v1601
        %v1625 = vmul.f32 %v1549, %v1603
        %v1626 = vmul.f32 %v1554, %v1605
        %v1627 = vmul.f32 %v1557, %v1607
        %v1628 = vmul.f32 %v1562, %v1609
        %v1629 = vmul.f32 %v1565, %v1611
        %v1630 = vmul.f32 %v1570, %v1613
        %v1631 = vmul.f32 %v1573, %v1615
        %v1632 = vmul.f32 %v1624, 64.0
        %v1633 = vmul.f32 %v1625, 64.0
        %v1634 = vmul.f32 %v1626, 64.0
        %v1635 = vmul.f32 %v1627, 64.0
        %v1636 = vmul.f32 %v1628, 64.0
        %v1637 = vmul.f32 %v1629, 64.0
        %v1638 = vmul.f32 %v1630, 64.0
        %v1639 = vmul.f32 %v1631, 64.0
        %1640 = vst.msk [vmem:[#allocation2 + $0x40] sm:$0xff] %vm371, %v1632
        %1641 = vst.msk [vmem:[#allocation2 + $0x48] sm:$0xff] %vm371, %v1633
        %1642 = vst.msk [vmem:[#allocation2 + $0x50] sm:$0xff] %vm371, %v1634
        %1643 = vst.msk [vmem:[#allocation2 + $0x58] sm:$0xff] %vm371, %v1635
        %1644 = vst.msk [vmem:[#allocation2 + $0x60] sm:$0xff] %vm371, %v1636
        %1645 = vst.msk [vmem:[#allocation2 + $0x68] sm:$0xff] %vm371, %v1637
        %1646 = vst.msk [vmem:[#allocation2 + $0x70] sm:$0xff] %vm371, %v1638
        %1647 = vst.msk [vmem:[#allocation2 + $0x78] sm:$0xff] %vm371, %v1639
        %v1648 = vld [vmem:[#allocation2] sm:$0xff]
        %v1649 = vld [vmem:[#allocation2 + $0x8] sm:$0xff]
        %v1650 = vld [vmem:[#allocation2 + $0x10] sm:$0xff]
        %v1651 = vld [vmem:[#allocation2 + $0x18] sm:$0xff]
        %v1652 = vld [vmem:[#allocation2 + $0x20] sm:$0xff]
        %v1653 = vld [vmem:[#allocation2 + $0x28] sm:$0xff]
        %v1654 = vld [vmem:[#allocation2 + $0x30] sm:$0xff]
        %v1655 = vld [vmem:[#allocation2 + $0x38] sm:$0xff]
        %v1656 = vld [vmem:[#allocation2 + $0x40] sm:$0xff]
        %v1657 = vld [vmem:[#allocation2 + $0x48] sm:$0xff]
        %v1658 = vld [vmem:[#allocation2 + $0x50] sm:$0xff]
        %v1659 = vld [vmem:[#allocation2 + $0x58] sm:$0xff]
        %v1660 = vld [vmem:[#allocation2 + $0x60] sm:$0xff]
        %v1661 = vld [vmem:[#allocation2 + $0x68] sm:$0xff]
        %v1662 = vld [vmem:[#allocation2 + $0x70] sm:$0xff]
        %v1663 = vld [vmem:[#allocation2 + $0x78] sm:$0xff]
        %v1664 = vpack.c.bf16 %v1649, %v1648
        %v1665 = vpack.c.bf16 %v1651, %v1650
        %v1666 = vpack.c.bf16 %v1653, %v1652
        %v1667 = vpack.c.bf16 %v1655, %v1654
        %v1668 = vpack.c.bf16 %v1657, %v1656
        %v1669 = vpack.c.bf16 %v1659, %v1658
        %v1670 = vpack.c.bf16 %v1661, %v1660
        %v1671 = vpack.c.bf16 %v1663, %v1662
        %v1680 = vunpack.c.l.b16 %v278
        %v1681 = vunpack.c.l.b16 %v279
        %v1682 = vunpack.c.l.b16 %v280
        %v1683 = vunpack.c.l.b16 %v281
        %v1684 = vunpack.c.l.b16 %v282
        %v1685 = vunpack.c.l.b16 %v283
        %v1686 = vunpack.c.l.b16 %v284
        %v1687 = vunpack.c.l.b16 %v285
        %v1688 = vpack.c.b16 %v1681, %v1680
        %v1689 = vpack.c.b16 %v1683, %v1682
        %v1690 = vpack.c.b16 %v1685, %v1684
        %v1691 = vpack.c.b16 %v1687, %v1686
        %v1697 = vsel %vm371, %v1664, 0
        %v1700 = vsel %vm371, %v1665, 0
        %v1703 = vsel %vm371, %v1666, 0
        %v1706 = vsel %vm371, %v1667, 0
        %v1709 = vsel %vm371, %v1668, 0
        %v1712 = vsel %vm371, %v1669, 0
        %v1715 = vsel %vm371, %v1670, 0
        %v1718 = vsel %vm371, %v1671, 0
        %1720 = vmatprep.subr.bf16.mxu0 0
        %1721 = vmatpush1.bf16.msra.mxu0 0
        %1722 = vmatprep.subr.bf16.mxu0 0
        %1723 = vmatpush1.bf16.msra.mxu0 0
        %1724 = vmatprep.subr.bf16.mxu0 0
        %1725 = vmatpush1.bf16.msra.mxu0 0
        %1726 = vmatprep.subr.bf16.mxu0 0
        %1727 = vmatpush1.bf16.msra.mxu0 0
        %1728 = vmatprep.subr.bf16.mxu0 0
        %1729 = vmatpush1.bf16.msra.mxu0 %v1691
        %1730 = vmatprep.subr.bf16.mxu0 0
        %1731 = vmatpush1.bf16.msra.mxu0 %v1690
        %1732 = vmatprep.subr.bf16.mxu0 0
        %1733 = vmatpush1.bf16.msra.mxu0 %v1689
        %1734 = vmatprep.subr.bf16.mxu0 0
        %1735 = vmatpush1.bf16.msra.mxu0 %v1688
        %1736 = vmatprep.subr.bf16.mxu0 0
        %1737 = vmatpush2.bf16.msra.mxu0 0
        %1738 = vmatprep.subr.bf16.mxu0 0
        %1739 = vmatpush2.bf16.msra.mxu0 0
        %1740 = vmatprep.subr.bf16.mxu0 0
        %1741 = vmatpush2.bf16.msra.mxu0 0
        %1742 = vmatprep.subr.bf16.mxu0 0
        %1743 = vmatpush2.bf16.msra.mxu0 0
        %1744 = vmatprep.subr.bf16.mxu0 0
        %1745 = vmatpush2.bf16.msra.mxu0 0
        %1746 = vmatprep.subr.bf16.mxu0 0
        %1747 = vmatpush2.bf16.msra.mxu0 0
        %1748 = vmatprep.subr.bf16.mxu0 0
        %1749 = vmatpush2.bf16.msra.mxu0 0
        %1750 = vmatprep.subr.bf16.mxu0 0
        %1751 = vmatpush2.bf16.msra.mxu0 0
        %1752 = vmatprep.mubr.bf16.mxu0 0
        %1753 = vmatmul.mubr.bf16.gmra.mxu0 %v1697
        %v1754 = vpop.f32.mrf.mxu0
        %v1755 = vadd.f32 0.0, %v1754
        %v1756 = vpop.f32.mrf.mxu0
        %v1757 = vpop.f32.mrf.mxu0
        %v1758 = vadd.f32 0.0, %v1757
        %v1759 = vpop.f32.mrf.mxu0
        %1760 = vmatprep.mubr.bf16.mxu0 0
        %1761 = vmatmul.mubr.bf16.gmra.mxu0 %v1700
        %v1762 = vpop.f32.mrf.mxu0
        %v1763 = vadd.f32 0.0, %v1762
        %v1764 = vpop.f32.mrf.mxu0
        %v1765 = vpop.f32.mrf.mxu0
        %v1766 = vadd.f32 0.0, %v1765
        %v1767 = vpop.f32.mrf.mxu0
        %1768 = vmatprep.mubr.bf16.mxu0 0
        %1769 = vmatmul.mubr.bf16.gmra.mxu0 %v1703
        %v1770 = vpop.f32.mrf.mxu0
        %v1771 = vadd.f32 0.0, %v1770
        %v1772 = vpop.f32.mrf.mxu0
        %v1773 = vpop.f32.mrf.mxu0
        %v1774 = vadd.f32 0.0, %v1773
        %v1775 = vpop.f32.mrf.mxu0
        %1776 = vmatprep.mubr.bf16.mxu0 0
        %1777 = vmatmul.mubr.bf16.gmra.mxu0 %v1706
        %v1778 = vpop.f32.mrf.mxu0
        %v1779 = vadd.f32 0.0, %v1778
        %v1780 = vpop.f32.mrf.mxu0
        %v1781 = vpop.f32.mrf.mxu0
        %v1782 = vadd.f32 0.0, %v1781
        %v1783 = vpop.f32.mrf.mxu0
        %1784 = vmatprep.mubr.bf16.mxu0 0
        %1785 = vmatmul.mubr.bf16.gmra.mxu0 %v1709
        %v1786 = vpop.f32.mrf.mxu0
        %v1787 = vadd.f32 0.0, %v1786
        %v1788 = vpop.f32.mrf.mxu0
        %v1789 = vpop.f32.mrf.mxu0
        %v1790 = vadd.f32 0.0, %v1789
        %v1791 = vpop.f32.mrf.mxu0
        %1792 = vmatprep.mubr.bf16.mxu0 0
        %1793 = vmatmul.mubr.bf16.gmra.mxu0 %v1712
        %v1794 = vpop.f32.mrf.mxu0
        %v1795 = vadd.f32 0.0, %v1794
        %v1796 = vpop.f32.mrf.mxu0
        %v1797 = vpop.f32.mrf.mxu0
        %v1798 = vadd.f32 0.0, %v1797
        %v1799 = vpop.f32.mrf.mxu0
        %1800 = vmatprep.mubr.bf16.mxu0 0
        %1801 = vmatmul.mubr.bf16.gmra.mxu0 %v1715
        %v1802 = vpop.f32.mrf.mxu0
        %v1803 = vadd.f32 0.0, %v1802
        %v1804 = vpop.f32.mrf.mxu0
        %v1805 = vpop.f32.mrf.mxu0
        %v1806 = vadd.f32 0.0, %v1805
        %v1807 = vpop.f32.mrf.mxu0
        %1808 = vmatprep.mubr.bf16.mxu0 0
        %1809 = vmatmul.mubr.bf16.gmra.mxu0 %v1718
        %v1810 = vpop.f32.mrf.mxu0
        %v1811 = vadd.f32 0.0, %v1810
        %v1812 = vpop.f32.mrf.mxu0
        %v1813 = vpop.f32.mrf.mxu0
        %v1814 = vadd.f32 0.0, %v1813
        %v1815 = vpop.f32.mrf.mxu0
        %1816 = vdwg.mxu0
        %v1817 = vsel %vm371, %v1755, 0.0
        %1818 = vadd.xlane.f32.xlu0 %v1817
        %v1819 = vpop.xlane.xlu0 %1818
        %v1820 = vsel %vm371, %v1758, 0.0
        %1821 = vadd.xlane.f32.xlu0 %v1820
        %v1822 = vpop.xlane.xlu0 %1821
        %v1823 = vsel %vm371, %v1763, 0.0
        %1824 = vadd.xlane.f32.xlu0 %v1823
        %v1825 = vpop.xlane.xlu0 %1824
        %v1826 = vsel %vm371, %v1766, 0.0
        %1827 = vadd.xlane.f32.xlu0 %v1826
        %v1828 = vpop.xlane.xlu0 %1827
        %v1829 = vsel %vm371, %v1771, 0.0
        %1830 = vadd.xlane.f32.xlu0 %v1829
        %v1831 = vpop.xlane.xlu0 %1830
        %v1832 = vsel %vm371, %v1774, 0.0
        %1833 = vadd.xlane.f32.xlu0 %v1832
        %v1834 = vpop.xlane.xlu0 %1833
        %v1835 = vsel %vm371, %v1779, 0.0
        %1836 = vadd.xlane.f32.xlu0 %v1835
        %v1837 = vpop.xlane.xlu0 %1836
        %v1838 = vsel %vm371, %v1782, 0.0
        %1839 = vadd.xlane.f32.xlu0 %v1838
        %v1840 = vpop.xlane.xlu0 %1839
        %v1841 = vsel %vm371, %v1787, 0.0
        %1842 = vadd.xlane.f32.xlu0 %v1841
        %v1843 = vpop.xlane.xlu0 %1842
        %v1844 = vsel %vm371, %v1790, 0.0
        %1845 = vadd.xlane.f32.xlu0 %v1844
        %v1846 = vpop.xlane.xlu0 %1845
        %v1847 = vsel %vm371, %v1795, 0.0
        %1848 = vadd.xlane.f32.xlu0 %v1847
        %v1849 = vpop.xlane.xlu0 %1848
        %v1850 = vsel %vm371, %v1798, 0.0
        %1851 = vadd.xlane.f32.xlu0 %v1850
        %v1852 = vpop.xlane.xlu0 %1851
        %v1853 = vsel %vm371, %v1803, 0.0
        %1854 = vadd.xlane.f32.xlu0 %v1853
        %v1855 = vpop.xlane.xlu0 %1854
        %v1856 = vsel %vm371, %v1806, 0.0
        %1857 = vadd.xlane.f32.xlu0 %v1856
        %v1858 = vpop.xlane.xlu0 %1857
        %v1859 = vsel %vm371, %v1811, 0.0
        %1860 = vadd.xlane.f32.xlu0 %v1859
        %v1861 = vpop.xlane.xlu0 %1860
        %v1862 = vsel %vm371, %v1814, 0.0
        %1863 = vadd.xlane.f32.xlu0 %v1862
        %v1864 = vpop.xlane.xlu0 %1863
        %v1865 = vmul.f32 %v1819, %v541
        %v1866 = vmul.f32 %v1822, %v541
        %v1867 = vmul.f32 %v1825, %v541
        %v1868 = vmul.f32 %v1828, %v541
        %v1869 = vmul.f32 %v1831, %v541
        %v1870 = vmul.f32 %v1834, %v541
        %v1871 = vmul.f32 %v1837, %v541
        %v1872 = vmul.f32 %v1840, %v541
        %v1873 = vmul.f32 %v1843, %v541
        %v1874 = vmul.f32 %v1846, %v541
        %v1875 = vmul.f32 %v1849, %v541
        %v1876 = vmul.f32 %v1852, %v541
        %v1877 = vmul.f32 %v1855, %v541
        %v1878 = vmul.f32 %v1858, %v541
        %v1879 = vmul.f32 %v1861, %v541
        %v1880 = vmul.f32 %v1864, %v541
        %v1881 = vsub.f32 %v1755, %v1865
        %v1882 = vsub.f32 %v1758, %v1866
        %v1883 = vsub.f32 %v1763, %v1867
        %v1884 = vsub.f32 %v1766, %v1868
        %v1885 = vsub.f32 %v1771, %v1869
        %v1886 = vsub.f32 %v1774, %v1870
        %v1887 = vsub.f32 %v1779, %v1871
        %v1888 = vsub.f32 %v1782, %v1872
        %v1889 = vsub.f32 %v1787, %v1873
        %v1890 = vsub.f32 %v1790, %v1874
        %v1891 = vsub.f32 %v1795, %v1875
        %v1892 = vsub.f32 %v1798, %v1876
        %v1893 = vsub.f32 %v1803, %v1877
        %v1894 = vsub.f32 %v1806, %v1878
        %v1895 = vsub.f32 %v1811, %v1879
        %v1896 = vsub.f32 %v1814, %v1880
        %v1897 = vmul.f32 %v1881, %v1881
        %v1898 = vmul.f32 %v1882, %v1882
        %v1899 = vmul.f32 %v1883, %v1883
        %v1900 = vmul.f32 %v1884, %v1884
        %v1901 = vmul.f32 %v1885, %v1885
        %v1902 = vmul.f32 %v1886, %v1886
        %v1903 = vmul.f32 %v1887, %v1887
        %v1904 = vmul.f32 %v1888, %v1888
        %v1905 = vmul.f32 %v1889, %v1889
        %v1906 = vmul.f32 %v1890, %v1890
        %v1907 = vmul.f32 %v1891, %v1891
        %v1908 = vmul.f32 %v1892, %v1892
        %v1909 = vmul.f32 %v1893, %v1893
        %v1910 = vmul.f32 %v1894, %v1894
        %v1911 = vmul.f32 %v1895, %v1895
        %v1912 = vmul.f32 %v1896, %v1896
        %v1913 = vsel %vm371, %v1897, 0.0
        %1914 = vadd.xlane.f32.xlu0 %v1913
        %v1915 = vpop.xlane.xlu0 %1914
        %v1916 = vsel %vm371, %v1898, 0.0
        %1917 = vadd.xlane.f32.xlu0 %v1916
        %v1918 = vpop.xlane.xlu0 %1917
        %v1919 = vsel %vm371, %v1899, 0.0
        %1920 = vadd.xlane.f32.xlu0 %v1919
        %v1921 = vpop.xlane.xlu0 %1920
        %v1922 = vsel %vm371, %v1900, 0.0
        %1923 = vadd.xlane.f32.xlu0 %v1922
        %v1924 = vpop.xlane.xlu0 %1923
        %v1925 = vsel %vm371, %v1901, 0.0
        %1926 = vadd.xlane.f32.xlu0 %v1925
        %v1927 = vpop.xlane.xlu0 %1926
        %v1928 = vsel %vm371, %v1902, 0.0
        %1929 = vadd.xlane.f32.xlu0 %v1928
        %v1930 = vpop.xlane.xlu0 %1929
        %v1931 = vsel %vm371, %v1903, 0.0
        %1932 = vadd.xlane.f32.xlu0 %v1931
        %v1933 = vpop.xlane.xlu0 %1932
        %v1934 = vsel %vm371, %v1904, 0.0
        %1935 = vadd.xlane.f32.xlu0 %v1934
        %v1936 = vpop.xlane.xlu0 %1935
        %v1937 = vsel %vm371, %v1905, 0.0
        %1938 = vadd.xlane.f32.xlu0 %v1937
        %v1939 = vpop.xlane.xlu0 %1938
        %v1940 = vsel %vm371, %v1906, 0.0
        %1941 = vadd.xlane.f32.xlu0 %v1940
        %v1942 = vpop.xlane.xlu0 %1941
        %v1943 = vsel %vm371, %v1907, 0.0
        %1944 = vadd.xlane.f32.xlu0 %v1943
        %v1945 = vpop.xlane.xlu0 %1944
        %v1946 = vsel %vm371, %v1908, 0.0
        %1947 = vadd.xlane.f32.xlu0 %v1946
        %v1948 = vpop.xlane.xlu0 %1947
        %v1949 = vsel %vm371, %v1909, 0.0
        %1950 = vadd.xlane.f32.xlu0 %v1949
        %v1951 = vpop.xlane.xlu0 %1950
        %v1952 = vsel %vm371, %v1910, 0.0
        %1953 = vadd.xlane.f32.xlu0 %v1952
        %v1954 = vpop.xlane.xlu0 %1953
        %v1955 = vsel %vm371, %v1911, 0.0
        %1956 = vadd.xlane.f32.xlu0 %v1955
        %v1957 = vpop.xlane.xlu0 %1956
        %v1958 = vsel %vm371, %v1912, 0.0
        %1959 = vadd.xlane.f32.xlu0 %v1958
        %v1960 = vpop.xlane.xlu0 %1959
        %v1961 = vmul.f32 %v1915, %v541
        %v1962 = vmul.f32 %v1918, %v541
        %v1963 = vmul.f32 %v1921, %v541
        %v1964 = vmul.f32 %v1924, %v541
        %v1965 = vmul.f32 %v1927, %v541
        %v1966 = vmul.f32 %v1930, %v541
        %v1967 = vmul.f32 %v1933, %v541
        %v1968 = vmul.f32 %v1936, %v541
        %v1969 = vmul.f32 %v1939, %v541
        %v1970 = vmul.f32 %v1942, %v541
        %v1971 = vmul.f32 %v1945, %v541
        %v1972 = vmul.f32 %v1948, %v541
        %v1973 = vmul.f32 %v1951, %v541
        %v1974 = vmul.f32 %v1954, %v541
        %v1975 = vmul.f32 %v1957, %v541
        %v1976 = vmul.f32 %v1960, %v541
        %v1977 = vadd.f32 %v1961, 1e-05
        %v1978 = vadd.f32 %v1962, 1e-05
        %v1979 = vadd.f32 %v1963, 1e-05
        %v1980 = vadd.f32 %v1964, 1e-05
        %v1981 = vadd.f32 %v1965, 1e-05
        %v1982 = vadd.f32 %v1966, 1e-05
        %v1983 = vadd.f32 %v1967, 1e-05
        %v1984 = vadd.f32 %v1968, 1e-05
        %v1985 = vadd.f32 %v1969, 1e-05
        %v1986 = vadd.f32 %v1970, 1e-05
        %v1987 = vadd.f32 %v1971, 1e-05
        %v1988 = vadd.f32 %v1972, 1e-05
        %v1989 = vadd.f32 %v1973, 1e-05
        %v1990 = vadd.f32 %v1974, 1e-05
        %v1991 = vadd.f32 %v1975, 1e-05
        %v1992 = vadd.f32 %v1976, 1e-05
        %v1993 = vrsqrt.pop %v1977
        %v1994 = vrsqrt.pop %v1978
        %v1995 = vrsqrt.pop %v1979
        %v1996 = vrsqrt.pop %v1980
        %v1997 = vrsqrt.pop %v1981
        %v1998 = vrsqrt.pop %v1982
        %v1999 = vrsqrt.pop %v1983
        %v2000 = vrsqrt.pop %v1984
        %v2001 = vrsqrt.pop %v1985
        %v2002 = vrsqrt.pop %v1986
        %v2003 = vrsqrt.pop %v1987
        %v2004 = vrsqrt.pop %v1988
        %v2005 = vrsqrt.pop %v1989
        %v2006 = vrsqrt.pop %v1990
        %v2007 = vrsqrt.pop %v1991
        %v2008 = vrsqrt.pop %v1992
        %v2009 = vmul.f32 %v1881, %v1993
        %v2010 = vmul.f32 %v1882, %v1994
        %v2011 = vmul.f32 %v1883, %v1995
        %v2012 = vmul.f32 %v1884, %v1996
        %v2013 = vmul.f32 %v1885, %v1997
        %v2014 = vmul.f32 %v1886, %v1998
        %v2015 = vmul.f32 %v1887, %v1999
        %v2016 = vmul.f32 %v1888, %v2000
        %v2017 = vmul.f32 %v1889, %v2001
        %v2018 = vmul.f32 %v1890, %v2002
        %v2019 = vmul.f32 %v1891, %v2003
        %v2020 = vmul.f32 %v1892, %v2004
        %v2021 = vmul.f32 %v1893, %v2005
        %v2022 = vmul.f32 %v1894, %v2006
        %v2023 = vmul.f32 %v1895, %v2007
        %v2024 = vmul.f32 %v1896, %v2008
        %v2025 = vlaneseq
        %v2026 = vshrl.u32 %v2025, 7
        %v2027 = vsub.s32 3, %v2026
        %v2028 = vrot.slane %v318, %v2027
        %v2029 = vmul.f32 %v2009, %v2028
        %v2030 = vmul.f32 %v2010, %v2028
        %v2031 = vmul.f32 %v2011, %v2028
        %v2032 = vmul.f32 %v2012, %v2028
        %v2033 = vmul.f32 %v2013, %v2028
        %v2034 = vmul.f32 %v2014, %v2028
        %v2035 = vmul.f32 %v2015, %v2028
        %v2036 = vmul.f32 %v2016, %v2028
        %v2037 = vmul.f32 %v2017, %v2028
        %v2038 = vmul.f32 %v2018, %v2028
        %v2039 = vmul.f32 %v2019, %v2028
        %v2040 = vmul.f32 %v2020, %v2028
        %v2041 = vmul.f32 %v2021, %v2028
        %v2042 = vmul.f32 %v2022, %v2028
        %v2043 = vmul.f32 %v2023, %v2028
        %v2044 = vmul.f32 %v2024, %v2028
        %v2045 = vlaneseq
        %v2046 = vshrl.u32 %v2045, 7
        %v2047 = vsub.s32 4, %v2046
        %v2048 = vrot.slane %v318, %v2047
        %v2049 = vadd.f32 %v2029, %v2048
        %v2050 = vadd.f32 %v2030, %v2048
        %v2051 = vadd.f32 %v2031, %v2048
        %v2052 = vadd.f32 %v2032, %v2048
        %v2053 = vadd.f32 %v2033, %v2048
        %v2054 = vadd.f32 %v2034, %v2048
        %v2055 = vadd.f32 %v2035, %v2048
        %v2056 = vadd.f32 %v2036, %v2048
        %v2057 = vadd.f32 %v2037, %v2048
        %v2058 = vadd.f32 %v2038, %v2048
        %v2059 = vadd.f32 %v2039, %v2048
        %v2060 = vadd.f32 %v2040, %v2048
        %v2061 = vadd.f32 %v2041, %v2048
        %v2062 = vadd.f32 %v2042, %v2048
        %v2063 = vadd.f32 %v2043, %v2048
        %v2064 = vadd.f32 %v2044, %v2048
        %v2065 = vpack.c.bf16 %v2050, %v2049
        %v2066 = vpack.c.bf16 %v2052, %v2051
        %v2067 = vpack.c.bf16 %v2054, %v2053
        %v2068 = vpack.c.bf16 %v2056, %v2055
        %v2069 = vpack.c.bf16 %v2058, %v2057
        %v2070 = vpack.c.bf16 %v2060, %v2059
        %v2071 = vpack.c.bf16 %v2062, %v2061
        %v2072 = vpack.c.bf16 %v2064, %v2063
        %v2081 = vunpack.c.l.b16 %v294
        %v2082 = vunpack.c.l.b16 %v295
        %v2083 = vunpack.c.l.b16 %v296
        %v2084 = vunpack.c.l.b16 %v297
        %v2085 = vunpack.c.l.b16 %v298
        %v2086 = vunpack.c.l.b16 %v299
        %v2087 = vunpack.c.l.b16 %v300
        %v2088 = vunpack.c.l.b16 %v301
        %v2089 = vpack.c.b16 %v2082, %v2081
        %v2090 = vpack.c.b16 %v2084, %v2083
        %v2091 = vpack.c.b16 %v2086, %v2085
        %v2092 = vpack.c.b16 %v2088, %v2087
        %v2098 = vsel %vm371, %v2065, 0
        %v2101 = vsel %vm371, %v2066, 0
        %v2104 = vsel %vm371, %v2067, 0
        %v2107 = vsel %vm371, %v2068, 0
        %v2110 = vsel %vm371, %v2069, 0
        %v2113 = vsel %vm371, %v2070, 0
        %v2116 = vsel %vm371, %v2071, 0
        %v2119 = vsel %vm371, %v2072, 0
        %2121 = vmatprep.subr.bf16.mxu0 0
        %2122 = vmatpush1.bf16.msra.mxu0 0
        %2123 = vmatprep.subr.bf16.mxu0 0
        %2124 = vmatpush1.bf16.msra.mxu0 0
        %2125 = vmatprep.subr.bf16.mxu0 0
        %2126 = vmatpush1.bf16.msra.mxu0 0
        %2127 = vmatprep.subr.bf16.mxu0 0
        %2128 = vmatpush1.bf16.msra.mxu0 0
        %2129 = vmatprep.subr.bf16.mxu0 0
        %2130 = vmatpush1.bf16.msra.mxu0 %v2092
        %2131 = vmatprep.subr.bf16.mxu0 0
        %2132 = vmatpush1.bf16.msra.mxu0 %v2091
        %2133 = vmatprep.subr.bf16.mxu0 0
        %2134 = vmatpush1.bf16.msra.mxu0 %v2090
        %2135 = vmatprep.subr.bf16.mxu0 0
        %2136 = vmatpush1.bf16.msra.mxu0 %v2089
        %2137 = vmatprep.subr.bf16.mxu0 0
        %2138 = vmatpush2.bf16.msra.mxu0 0
        %2139 = vmatprep.subr.bf16.mxu0 0
        %2140 = vmatpush2.bf16.msra.mxu0 0
        %2141 = vmatprep.subr.bf16.mxu0 0
        %2142 = vmatpush2.bf16.msra.mxu0 0
        %2143 = vmatprep.subr.bf16.mxu0 0
        %2144 = vmatpush2.bf16.msra.mxu0 0
        %2145 = vmatprep.subr.bf16.mxu0 0
        %2146 = vmatpush2.bf16.msra.mxu0 0
        %2147 = vmatprep.subr.bf16.mxu0 0
        %2148 = vmatpush2.bf16.msra.mxu0 0
        %2149 = vmatprep.subr.bf16.mxu0 0
        %2150 = vmatpush2.bf16.msra.mxu0 0
        %2151 = vmatprep.subr.bf16.mxu0 0
        %2152 = vmatpush2.bf16.msra.mxu0 0
        %2153 = vmatprep.mubr.bf16.mxu0 0
        %2154 = vmatmul.mubr.bf16.gmra.mxu0 %v2098
        %v2155 = vpop.f32.mrf.mxu0
        %v2156 = vadd.f32 0.0, %v2155
        %v2157 = vpop.f32.mrf.mxu0
        %v2158 = vpop.f32.mrf.mxu0
        %v2159 = vadd.f32 0.0, %v2158
        %v2160 = vpop.f32.mrf.mxu0
        %2161 = vmatprep.mubr.bf16.mxu0 0
        %2162 = vmatmul.mubr.bf16.gmra.mxu0 %v2101
        %v2163 = vpop.f32.mrf.mxu0
        %v2164 = vadd.f32 0.0, %v2163
        %v2165 = vpop.f32.mrf.mxu0
        %v2166 = vpop.f32.mrf.mxu0
        %v2167 = vadd.f32 0.0, %v2166
        %v2168 = vpop.f32.mrf.mxu0
        %2169 = vmatprep.mubr.bf16.mxu0 0
        %2170 = vmatmul.mubr.bf16.gmra.mxu0 %v2104
        %v2171 = vpop.f32.mrf.mxu0
        %v2172 = vadd.f32 0.0, %v2171
        %v2173 = vpop.f32.mrf.mxu0
        %v2174 = vpop.f32.mrf.mxu0
        %v2175 = vadd.f32 0.0, %v2174
        %v2176 = vpop.f32.mrf.mxu0
        %2177 = vmatprep.mubr.bf16.mxu0 0
        %2178 = vmatmul.mubr.bf16.gmra.mxu0 %v2107
        %v2179 = vpop.f32.mrf.mxu0
        %v2180 = vadd.f32 0.0, %v2179
        %v2181 = vpop.f32.mrf.mxu0
        %v2182 = vpop.f32.mrf.mxu0
        %v2183 = vadd.f32 0.0, %v2182
        %v2184 = vpop.f32.mrf.mxu0
        %2185 = vmatprep.mubr.bf16.mxu0 0
        %2186 = vmatmul.mubr.bf16.gmra.mxu0 %v2110
        %v2187 = vpop.f32.mrf.mxu0
        %v2188 = vadd.f32 0.0, %v2187
        %v2189 = vpop.f32.mrf.mxu0
        %v2190 = vpop.f32.mrf.mxu0
        %v2191 = vadd.f32 0.0, %v2190
        %v2192 = vpop.f32.mrf.mxu0
        %2193 = vmatprep.mubr.bf16.mxu0 0
        %2194 = vmatmul.mubr.bf16.gmra.mxu0 %v2113
        %v2195 = vpop.f32.mrf.mxu0
        %v2196 = vadd.f32 0.0, %v2195
        %v2197 = vpop.f32.mrf.mxu0
        %v2198 = vpop.f32.mrf.mxu0
        %v2199 = vadd.f32 0.0, %v2198
        %v2200 = vpop.f32.mrf.mxu0
        %2201 = vmatprep.mubr.bf16.mxu0 0
        %2202 = vmatmul.mubr.bf16.gmra.mxu0 %v2116
        %v2203 = vpop.f32.mrf.mxu0
        %v2204 = vadd.f32 0.0, %v2203
        %v2205 = vpop.f32.mrf.mxu0
        %v2206 = vpop.f32.mrf.mxu0
        %v2207 = vadd.f32 0.0, %v2206
        %v2208 = vpop.f32.mrf.mxu0
        %2209 = vmatprep.mubr.bf16.mxu0 0
        %2210 = vmatmul.mubr.bf16.gmra.mxu0 %v2119
        %v2211 = vpop.f32.mrf.mxu0
        %v2212 = vadd.f32 0.0, %v2211
        %v2213 = vpop.f32.mrf.mxu0
        %v2214 = vpop.f32.mrf.mxu0
        %v2215 = vadd.f32 0.0, %v2214
        %v2216 = vpop.f32.mrf.mxu0
        %2217 = vdwg.mxu0
        %v2226 = vunpack.c.l.b16 %v286
        %v2227 = vunpack.c.l.b16 %v287
        %v2228 = vunpack.c.l.b16 %v288
        %v2229 = vunpack.c.l.b16 %v289
        %v2230 = vunpack.c.l.b16 %v290
        %v2231 = vunpack.c.l.b16 %v291
        %v2232 = vunpack.c.l.b16 %v292
        %v2233 = vunpack.c.l.b16 %v293
        %v2234 = vpack.c.b16 %v2227, %v2226
        %v2235 = vpack.c.b16 %v2229, %v2228
        %v2236 = vpack.c.b16 %v2231, %v2230
        %v2237 = vpack.c.b16 %v2233, %v2232
        %2242 = vmatprep.subr.bf16.mxu0 0
        %2243 = vmatpush1.bf16.msra.mxu0 0
        %2244 = vmatprep.subr.bf16.mxu0 0
        %2245 = vmatpush1.bf16.msra.mxu0 0
        %2246 = vmatprep.subr.bf16.mxu0 0
        %2247 = vmatpush1.bf16.msra.mxu0 0
        %2248 = vmatprep.subr.bf16.mxu0 0
        %2249 = vmatpush1.bf16.msra.mxu0 0
        %2250 = vmatprep.subr.bf16.mxu0 0
        %2251 = vmatpush1.bf16.msra.mxu0 %v2237
        %2252 = vmatprep.subr.bf16.mxu0 0
        %2253 = vmatpush1.bf16.msra.mxu0 %v2236
        %2254 = vmatprep.subr.bf16.mxu0 0
        %2255 = vmatpush1.bf16.msra.mxu0 %v2235
        %2256 = vmatprep.subr.bf16.mxu0 0
        %2257 = vmatpush1.bf16.msra.mxu0 %v2234
        %2258 = vmatprep.subr.bf16.mxu0 0
        %2259 = vmatpush2.bf16.msra.mxu0 0
        %2260 = vmatprep.subr.bf16.mxu0 0
        %2261 = vmatpush2.bf16.msra.mxu0 0
        %2262 = vmatprep.subr.bf16.mxu0 0
        %2263 = vmatpush2.bf16.msra.mxu0 0
        %2264 = vmatprep.subr.bf16.mxu0 0
        %2265 = vmatpush2.bf16.msra.mxu0 0
        %2266 = vmatprep.subr.bf16.mxu0 0
        %2267 = vmatpush2.bf16.msra.mxu0 0
        %2268 = vmatprep.subr.bf16.mxu0 0
        %2269 = vmatpush2.bf16.msra.mxu0 0
        %2270 = vmatprep.subr.bf16.mxu0 0
        %2271 = vmatpush2.bf16.msra.mxu0 0
        %2272 = vmatprep.subr.bf16.mxu0 0
        %2273 = vmatpush2.bf16.msra.mxu0 0
        %2274 = vmatprep.mubr.bf16.mxu0 0
        %2275 = vmatmul.mubr.bf16.gmra.mxu0 %v791
        %v2276 = vpop.f32.mrf.mxu0
        %v2277 = vadd.f32 %v2156, %v2276
        %v2278 = vpop.f32.mrf.mxu0
        %v2279 = vpop.f32.mrf.mxu0
        %v2280 = vadd.f32 %v2159, %v2279
        %v2281 = vpop.f32.mrf.mxu0
        %2282 = vmatprep.mubr.bf16.mxu0 0
        %2283 = vmatmul.mubr.bf16.gmra.mxu0 %v794
        %v2284 = vpop.f32.mrf.mxu0
        %v2285 = vadd.f32 %v2164, %v2284
        %v2286 = vpop.f32.mrf.mxu0
        %v2287 = vpop.f32.mrf.mxu0
        %v2288 = vadd.f32 %v2167, %v2287
        %v2289 = vpop.f32.mrf.mxu0
        %2290 = vmatprep.mubr.bf16.mxu0 0
        %2291 = vmatmul.mubr.bf16.gmra.mxu0 %v797
        %v2292 = vpop.f32.mrf.mxu0
        %v2293 = vadd.f32 %v2172, %v2292
        %v2294 = vpop.f32.mrf.mxu0
        %v2295 = vpop.f32.mrf.mxu0
        %v2296 = vadd.f32 %v2175, %v2295
        %v2297 = vpop.f32.mrf.mxu0
        %2298 = vmatprep.mubr.bf16.mxu0 0
        %2299 = vmatmul.mubr.bf16.gmra.mxu0 %v800
        %v2300 = vpop.f32.mrf.mxu0
        %v2301 = vadd.f32 %v2180, %v2300
        %v2302 = vpop.f32.mrf.mxu0
        %v2303 = vpop.f32.mrf.mxu0
        %v2304 = vadd.f32 %v2183, %v2303
        %v2305 = vpop.f32.mrf.mxu0
        %2306 = vmatprep.mubr.bf16.mxu0 0
        %2307 = vmatmul.mubr.bf16.gmra.mxu0 %v803
        %v2308 = vpop.f32.mrf.mxu0
        %v2309 = vadd.f32 %v2188, %v2308
        %v2310 = vpop.f32.mrf.mxu0
        %v2311 = vpop.f32.mrf.mxu0
        %v2312 = vadd.f32 %v2191, %v2311
        %v2313 = vpop.f32.mrf.mxu0
        %2314 = vmatprep.mubr.bf16.mxu0 0
        %2315 = vmatmul.mubr.bf16.gmra.mxu0 %v806
        %v2316 = vpop.f32.mrf.mxu0
        %v2317 = vadd.f32 %v2196, %v2316
        %v2318 = vpop.f32.mrf.mxu0
        %v2319 = vpop.f32.mrf.mxu0
        %v2320 = vadd.f32 %v2199, %v2319
        %v2321 = vpop.f32.mrf.mxu0
        %2322 = vmatprep.mubr.bf16.mxu0 0
        %2323 = vmatmul.mubr.bf16.gmra.mxu0 %v809
        %v2324 = vpop.f32.mrf.mxu0
        %v2325 = vadd.f32 %v2204, %v2324
        %v2326 = vpop.f32.mrf.mxu0
        %v2327 = vpop.f32.mrf.mxu0
        %v2328 = vadd.f32 %v2207, %v2327
        %v2329 = vpop.f32.mrf.mxu0
        %2330 = vmatprep.mubr.bf16.mxu0 0
        %2331 = vmatmul.mubr.bf16.gmra.mxu0 %v812
        %v2332 = vpop.f32.mrf.mxu0
        %v2333 = vadd.f32 %v2212, %v2332
        %v2334 = vpop.f32.mrf.mxu0
        %v2335 = vpop.f32.mrf.mxu0
        %v2336 = vadd.f32 %v2215, %v2335
        %v2337 = vpop.f32.mrf.mxu0
        %2338 = vdwg.mxu0
        %v2339 = vmax.f32 %v2277, 0.0
        %v2340 = vmax.f32 %v2280, 0.0
        %v2341 = vmax.f32 %v2285, 0.0
        %v2342 = vmax.f32 %v2288, 0.0
        %v2343 = vmax.f32 %v2293, 0.0
        %v2344 = vmax.f32 %v2296, 0.0
        %v2345 = vmax.f32 %v2301, 0.0
        %v2346 = vmax.f32 %v2304, 0.0
        %v2347 = vmax.f32 %v2309, 0.0
        %v2348 = vmax.f32 %v2312, 0.0
        %v2349 = vmax.f32 %v2317, 0.0
        %v2350 = vmax.f32 %v2320, 0.0
        %v2351 = vmax.f32 %v2325, 0.0
        %v2352 = vmax.f32 %v2328, 0.0
        %v2353 = vmax.f32 %v2333, 0.0
        %v2354 = vmax.f32 %v2336, 0.0
        %v2355 = vpack.c.bf16 %v2340, %v2339
        %v2356 = vpack.c.bf16 %v2342, %v2341
        %v2357 = vpack.c.bf16 %v2344, %v2343
        %v2358 = vpack.c.bf16 %v2346, %v2345
        %v2359 = vpack.c.bf16 %v2348, %v2347
        %v2360 = vpack.c.bf16 %v2350, %v2349
        %v2361 = vpack.c.bf16 %v2352, %v2351
        %v2362 = vpack.c.bf16 %v2354, %v2353
        %v2379 = vunpack.c.l.b16 %v302
        %v2380 = vunpack.c.l.b16 %v303
        %v2381 = vunpack.c.l.b16 %v304
        %v2382 = vunpack.c.l.b16 %v305
        %v2383 = vunpack.c.l.b16 %v306
        %v2384 = vunpack.c.l.b16 %v307
        %v2385 = vunpack.c.l.b16 %v308
        %v2386 = vunpack.c.l.b16 %v309
        %v2387 = vunpack.c.l.b16 %v310
        %v2388 = vunpack.c.l.b16 %v311
        %v2389 = vunpack.c.l.b16 %v312
        %v2390 = vunpack.c.l.b16 %v313
        %v2391 = vunpack.c.l.b16 %v314
        %v2392 = vunpack.c.l.b16 %v315
        %v2393 = vunpack.c.l.b16 %v316
        %v2394 = vunpack.c.l.b16 %v317
        %v2395 = vpack.c.b16 %v2380, %v2379
        %v2396 = vpack.c.b16 %v2382, %v2381
        %v2397 = vpack.c.b16 %v2384, %v2383
        %v2398 = vpack.c.b16 %v2386, %v2385
        %v2399 = vpack.c.b16 %v2388, %v2387
        %v2400 = vpack.c.b16 %v2390, %v2389
        %v2401 = vpack.c.b16 %v2392, %v2391
        %v2402 = vpack.c.b16 %v2394, %v2393
        %2411 = vmatprep.subr.bf16.mxu0 0
        %2412 = vmatpush1.bf16.msra.mxu0 %v2402
        %2413 = vmatprep.subr.bf16.mxu0 0
        %2414 = vmatpush1.bf16.msra.mxu0 %v2401
        %2415 = vmatprep.subr.bf16.mxu0 0
        %2416 = vmatpush1.bf16.msra.mxu0 %v2400
        %2417 = vmatprep.subr.bf16.mxu0 0
        %2418 = vmatpush1.bf16.msra.mxu0 %v2399
        %2419 = vmatprep.subr.bf16.mxu0 0
        %2420 = vmatpush1.bf16.msra.mxu0 %v2398
        %2421 = vmatprep.subr.bf16.mxu0 0
        %2422 = vmatpush1.bf16.msra.mxu0 %v2397
        %2423 = vmatprep.subr.bf16.mxu0 0
        %2424 = vmatpush1.bf16.msra.mxu0 %v2396
        %2425 = vmatprep.subr.bf16.mxu0 0
        %2426 = vmatpush1.bf16.msra.mxu0 %v2395
        %2427 = vmatprep.subr.bf16.mxu0 0
        %2428 = vmatpush2.bf16.msra.mxu0 0
        %2429 = vmatprep.subr.bf16.mxu0 0
        %2430 = vmatpush2.bf16.msra.mxu0 0
        %2431 = vmatprep.subr.bf16.mxu0 0
        %2432 = vmatpush2.bf16.msra.mxu0 0
        %2433 = vmatprep.subr.bf16.mxu0 0
        %2434 = vmatpush2.bf16.msra.mxu0 0
        %2435 = vmatprep.subr.bf16.mxu0 0
        %2436 = vmatpush2.bf16.msra.mxu0 0
        %2437 = vmatprep.subr.bf16.mxu0 0
        %2438 = vmatpush2.bf16.msra.mxu0 0
        %2439 = vmatprep.subr.bf16.mxu0 0
        %2440 = vmatpush2.bf16.msra.mxu0 0
        %2441 = vmatprep.subr.bf16.mxu0 0
        %2442 = vmatpush2.bf16.msra.mxu0 0
        %2443 = vmatprep.mubr.bf16.mxu0 0
        %2444 = vmatmul.mubr.bf16.gmra.mxu0 %v2355
        %v2445 = vpop.f32.mrf.mxu0
        %v2446 = vadd.f32 0.0, %v2445
        %v2447 = vpop.f32.mrf.mxu0
        %v2448 = vpop.f32.mrf.mxu0
        %v2449 = vadd.f32 0.0, %v2448
        %v2450 = vpop.f32.mrf.mxu0
        %2451 = vmatprep.mubr.bf16.mxu0 0
        %2452 = vmatmul.mubr.bf16.gmra.mxu0 %v2356
        %v2453 = vpop.f32.mrf.mxu0
        %v2454 = vadd.f32 0.0, %v2453
        %v2455 = vpop.f32.mrf.mxu0
        %v2456 = vpop.f32.mrf.mxu0
        %v2457 = vadd.f32 0.0, %v2456
        %v2458 = vpop.f32.mrf.mxu0
        %2459 = vmatprep.mubr.bf16.mxu0 0
        %2460 = vmatmul.mubr.bf16.gmra.mxu0 %v2357
        %v2461 = vpop.f32.mrf.mxu0
        %v2462 = vadd.f32 0.0, %v2461
        %v2463 = vpop.f32.mrf.mxu0
        %v2464 = vpop.f32.mrf.mxu0
        %v2465 = vadd.f32 0.0, %v2464
        %v2466 = vpop.f32.mrf.mxu0
        %2467 = vmatprep.mubr.bf16.mxu0 0
        %2468 = vmatmul.mubr.bf16.gmra.mxu0 %v2358
        %v2469 = vpop.f32.mrf.mxu0
        %v2470 = vadd.f32 0.0, %v2469
        %v2471 = vpop.f32.mrf.mxu0
        %v2472 = vpop.f32.mrf.mxu0
        %v2473 = vadd.f32 0.0, %v2472
        %v2474 = vpop.f32.mrf.mxu0
        %2475 = vmatprep.mubr.bf16.mxu0 0
        %2476 = vmatmul.mubr.bf16.gmra.mxu0 %v2359
        %v2477 = vpop.f32.mrf.mxu0
        %v2478 = vadd.f32 0.0, %v2477
        %v2479 = vpop.f32.mrf.mxu0
        %v2480 = vpop.f32.mrf.mxu0
        %v2481 = vadd.f32 0.0, %v2480
        %v2482 = vpop.f32.mrf.mxu0
        %2483 = vmatprep.mubr.bf16.mxu0 0
        %2484 = vmatmul.mubr.bf16.gmra.mxu0 %v2360
        %v2485 = vpop.f32.mrf.mxu0
        %v2486 = vadd.f32 0.0, %v2485
        %v2487 = vpop.f32.mrf.mxu0
        %v2488 = vpop.f32.mrf.mxu0
        %v2489 = vadd.f32 0.0, %v2488
        %v2490 = vpop.f32.mrf.mxu0
        %2491 = vmatprep.mubr.bf16.mxu0 0
        %2492 = vmatmul.mubr.bf16.gmra.mxu0 %v2361
        %v2493 = vpop.f32.mrf.mxu0
        %v2494 = vadd.f32 0.0, %v2493
        %v2495 = vpop.f32.mrf.mxu0
        %v2496 = vpop.f32.mrf.mxu0
        %v2497 = vadd.f32 0.0, %v2496
        %v2498 = vpop.f32.mrf.mxu0
        %2499 = vmatprep.mubr.bf16.mxu0 0
        %2500 = vmatmul.mubr.bf16.gmra.mxu0 %v2362
        %v2501 = vpop.f32.mrf.mxu0
        %v2502 = vadd.f32 0.0, %v2501
        %v2503 = vpop.f32.mrf.mxu0
        %v2504 = vpop.f32.mrf.mxu0
        %v2505 = vadd.f32 0.0, %v2504
        %v2506 = vpop.f32.mrf.mxu0
        %2507 = vdwg.mxu0
        %v2508 = vsel %vm371, %v2446, 0.0
        %2509 = vadd.xlane.f32.xlu0 %v2508
        %v2510 = vpop.xlane.xlu0 %2509
        %v2511 = vsel %vm371, %v2449, 0.0
        %2512 = vadd.xlane.f32.xlu0 %v2511
        %v2513 = vpop.xlane.xlu0 %2512
        %v2514 = vsel %vm371, %v2454, 0.0
        %2515 = vadd.xlane.f32.xlu0 %v2514
        %v2516 = vpop.xlane.xlu0 %2515
        %v2517 = vsel %vm371, %v2457, 0.0
        %2518 = vadd.xlane.f32.xlu0 %v2517
        %v2519 = vpop.xlane.xlu0 %2518
        %v2520 = vsel %vm371, %v2462, 0.0
        %2521 = vadd.xlane.f32.xlu0 %v2520
        %v2522 = vpop.xlane.xlu0 %2521
        %v2523 = vsel %vm371, %v2465, 0.0
        %2524 = vadd.xlane.f32.xlu0 %v2523
        %v2525 = vpop.xlane.xlu0 %2524
        %v2526 = vsel %vm371, %v2470, 0.0
        %2527 = vadd.xlane.f32.xlu0 %v2526
        %v2528 = vpop.xlane.xlu0 %2527
        %v2529 = vsel %vm371, %v2473, 0.0
        %2530 = vadd.xlane.f32.xlu0 %v2529
        %v2531 = vpop.xlane.xlu0 %2530
        %v2532 = vsel %vm371, %v2478, 0.0
        %2533 = vadd.xlane.f32.xlu0 %v2532
        %v2534 = vpop.xlane.xlu0 %2533
        %v2535 = vsel %vm371, %v2481, 0.0
        %2536 = vadd.xlane.f32.xlu0 %v2535
        %v2537 = vpop.xlane.xlu0 %2536
        %v2538 = vsel %vm371, %v2486, 0.0
        %2539 = vadd.xlane.f32.xlu0 %v2538
        %v2540 = vpop.xlane.xlu0 %2539
        %v2541 = vsel %vm371, %v2489, 0.0
        %2542 = vadd.xlane.f32.xlu0 %v2541
        %v2543 = vpop.xlane.xlu0 %2542
        %v2544 = vsel %vm371, %v2494, 0.0
        %2545 = vadd.xlane.f32.xlu0 %v2544
        %v2546 = vpop.xlane.xlu0 %2545
        %v2547 = vsel %vm371, %v2497, 0.0
        %2548 = vadd.xlane.f32.xlu0 %v2547
        %v2549 = vpop.xlane.xlu0 %2548
        %v2550 = vsel %vm371, %v2502, 0.0
        %2551 = vadd.xlane.f32.xlu0 %v2550
        %v2552 = vpop.xlane.xlu0 %2551
        %v2553 = vsel %vm371, %v2505, 0.0
        %2554 = vadd.xlane.f32.xlu0 %v2553
        %v2555 = vpop.xlane.xlu0 %2554
        %v2556 = vmul.f32 %v2510, %v541
        %v2557 = vmul.f32 %v2513, %v541
        %v2558 = vmul.f32 %v2516, %v541
        %v2559 = vmul.f32 %v2519, %v541
        %v2560 = vmul.f32 %v2522, %v541
        %v2561 = vmul.f32 %v2525, %v541
        %v2562 = vmul.f32 %v2528, %v541
        %v2563 = vmul.f32 %v2531, %v541
        %v2564 = vmul.f32 %v2534, %v541
        %v2565 = vmul.f32 %v2537, %v541
        %v2566 = vmul.f32 %v2540, %v541
        %v2567 = vmul.f32 %v2543, %v541
        %v2568 = vmul.f32 %v2546, %v541
        %v2569 = vmul.f32 %v2549, %v541
        %v2570 = vmul.f32 %v2552, %v541
        %v2571 = vmul.f32 %v2555, %v541
        %v2572 = vsub.f32 %v2446, %v2556
        %v2573 = vsub.f32 %v2449, %v2557
        %v2574 = vsub.f32 %v2454, %v2558
        %v2575 = vsub.f32 %v2457, %v2559
        %v2576 = vsub.f32 %v2462, %v2560
        %v2577 = vsub.f32 %v2465, %v2561
        %v2578 = vsub.f32 %v2470, %v2562
        %v2579 = vsub.f32 %v2473, %v2563
        %v2580 = vsub.f32 %v2478, %v2564
        %v2581 = vsub.f32 %v2481, %v2565
        %v2582 = vsub.f32 %v2486, %v2566
        %v2583 = vsub.f32 %v2489, %v2567
        %v2584 = vsub.f32 %v2494, %v2568
        %v2585 = vsub.f32 %v2497, %v2569
        %v2586 = vsub.f32 %v2502, %v2570
        %v2587 = vsub.f32 %v2505, %v2571
        %v2588 = vmul.f32 %v2572, %v2572
        %v2589 = vmul.f32 %v2573, %v2573
        %v2590 = vmul.f32 %v2574, %v2574
        %v2591 = vmul.f32 %v2575, %v2575
        %v2592 = vmul.f32 %v2576, %v2576
        %v2593 = vmul.f32 %v2577, %v2577
        %v2594 = vmul.f32 %v2578, %v2578
        %v2595 = vmul.f32 %v2579, %v2579
        %v2596 = vmul.f32 %v2580, %v2580
        %v2597 = vmul.f32 %v2581, %v2581
        %v2598 = vmul.f32 %v2582, %v2582
        %v2599 = vmul.f32 %v2583, %v2583
        %v2600 = vmul.f32 %v2584, %v2584
        %v2601 = vmul.f32 %v2585, %v2585
        %v2602 = vmul.f32 %v2586, %v2586
        %v2603 = vmul.f32 %v2587, %v2587
        %v2604 = vsel %vm371, %v2588, 0.0
        %2605 = vadd.xlane.f32.xlu0 %v2604
        %v2606 = vpop.xlane.xlu0 %2605
        %v2607 = vsel %vm371, %v2589, 0.0
        %2608 = vadd.xlane.f32.xlu0 %v2607
        %v2609 = vpop.xlane.xlu0 %2608
        %v2610 = vsel %vm371, %v2590, 0.0
        %2611 = vadd.xlane.f32.xlu0 %v2610
        %v2612 = vpop.xlane.xlu0 %2611
        %v2613 = vsel %vm371, %v2591, 0.0
        %2614 = vadd.xlane.f32.xlu0 %v2613
        %v2615 = vpop.xlane.xlu0 %2614
        %v2616 = vsel %vm371, %v2592, 0.0
        %2617 = vadd.xlane.f32.xlu0 %v2616
        %v2618 = vpop.xlane.xlu0 %2617
        %v2619 = vsel %vm371, %v2593, 0.0
        %2620 = vadd.xlane.f32.xlu0 %v2619
        %v2621 = vpop.xlane.xlu0 %2620
        %v2622 = vsel %vm371, %v2594, 0.0
        %2623 = vadd.xlane.f32.xlu0 %v2622
        %v2624 = vpop.xlane.xlu0 %2623
        %v2625 = vsel %vm371, %v2595, 0.0
        %2626 = vadd.xlane.f32.xlu0 %v2625
        %v2627 = vpop.xlane.xlu0 %2626
        %v2628 = vsel %vm371, %v2596, 0.0
        %2629 = vadd.xlane.f32.xlu0 %v2628
        %v2630 = vpop.xlane.xlu0 %2629
        %v2631 = vsel %vm371, %v2597, 0.0
        %2632 = vadd.xlane.f32.xlu0 %v2631
        %v2633 = vpop.xlane.xlu0 %2632
        %v2634 = vsel %vm371, %v2598, 0.0
        %2635 = vadd.xlane.f32.xlu0 %v2634
        %v2636 = vpop.xlane.xlu0 %2635
        %v2637 = vsel %vm371, %v2599, 0.0
        %2638 = vadd.xlane.f32.xlu0 %v2637
        %v2639 = vpop.xlane.xlu0 %2638
        %v2640 = vsel %vm371, %v2600, 0.0
        %2641 = vadd.xlane.f32.xlu0 %v2640
        %v2642 = vpop.xlane.xlu0 %2641
        %v2643 = vsel %vm371, %v2601, 0.0
        %2644 = vadd.xlane.f32.xlu0 %v2643
        %v2645 = vpop.xlane.xlu0 %2644
        %v2646 = vsel %vm371, %v2602, 0.0
        %2647 = vadd.xlane.f32.xlu0 %v2646
        %v2648 = vpop.xlane.xlu0 %2647
        %v2649 = vsel %vm371, %v2603, 0.0
        %2650 = vadd.xlane.f32.xlu0 %v2649
        %v2651 = vpop.xlane.xlu0 %2650
        %v2652 = vmul.f32 %v2606, %v541
        %v2653 = vmul.f32 %v2609, %v541
        %v2654 = vmul.f32 %v2612, %v541
        %v2655 = vmul.f32 %v2615, %v541
        %v2656 = vmul.f32 %v2618, %v541
        %v2657 = vmul.f32 %v2621, %v541
        %v2658 = vmul.f32 %v2624, %v541
        %v2659 = vmul.f32 %v2627, %v541
        %v2660 = vmul.f32 %v2630, %v541
        %v2661 = vmul.f32 %v2633, %v541
        %v2662 = vmul.f32 %v2636, %v541
        %v2663 = vmul.f32 %v2639, %v541
        %v2664 = vmul.f32 %v2642, %v541
        %v2665 = vmul.f32 %v2645, %v541
        %v2666 = vmul.f32 %v2648, %v541
        %v2667 = vmul.f32 %v2651, %v541
        %v2668 = vadd.f32 %v2652, 1e-05
        %v2669 = vadd.f32 %v2653, 1e-05
        %v2670 = vadd.f32 %v2654, 1e-05
        %v2671 = vadd.f32 %v2655, 1e-05
        %v2672 = vadd.f32 %v2656, 1e-05
        %v2673 = vadd.f32 %v2657, 1e-05
        %v2674 = vadd.f32 %v2658, 1e-05
        %v2675 = vadd.f32 %v2659, 1e-05
        %v2676 = vadd.f32 %v2660, 1e-05
        %v2677 = vadd.f32 %v2661, 1e-05
        %v2678 = vadd.f32 %v2662, 1e-05
        %v2679 = vadd.f32 %v2663, 1e-05
        %v2680 = vadd.f32 %v2664, 1e-05
        %v2681 = vadd.f32 %v2665, 1e-05
        %v2682 = vadd.f32 %v2666, 1e-05
        %v2683 = vadd.f32 %v2667, 1e-05
        %v2684 = vrsqrt.pop %v2668
        %v2685 = vrsqrt.pop %v2669
        %v2686 = vrsqrt.pop %v2670
        %v2687 = vrsqrt.pop %v2671
        %v2688 = vrsqrt.pop %v2672
        %v2689 = vrsqrt.pop %v2673
        %v2690 = vrsqrt.pop %v2674
        %v2691 = vrsqrt.pop %v2675
        %v2692 = vrsqrt.pop %v2676
        %v2693 = vrsqrt.pop %v2677
        %v2694 = vrsqrt.pop %v2678
        %v2695 = vrsqrt.pop %v2679
        %v2696 = vrsqrt.pop %v2680
        %v2697 = vrsqrt.pop %v2681
        %v2698 = vrsqrt.pop %v2682
        %v2699 = vrsqrt.pop %v2683
        %v2700 = vmul.f32 %v2572, %v2684
        %v2701 = vmul.f32 %v2573, %v2685
        %v2702 = vmul.f32 %v2574, %v2686
        %v2703 = vmul.f32 %v2575, %v2687
        %v2704 = vmul.f32 %v2576, %v2688
        %v2705 = vmul.f32 %v2577, %v2689
        %v2706 = vmul.f32 %v2578, %v2690
        %v2707 = vmul.f32 %v2579, %v2691
        %v2708 = vmul.f32 %v2580, %v2692
        %v2709 = vmul.f32 %v2581, %v2693
        %v2710 = vmul.f32 %v2582, %v2694
        %v2711 = vmul.f32 %v2583, %v2695
        %v2712 = vmul.f32 %v2584, %v2696
        %v2713 = vmul.f32 %v2585, %v2697
        %v2714 = vmul.f32 %v2586, %v2698
        %v2715 = vmul.f32 %v2587, %v2699
        %v2716 = vlaneseq
        %v2717 = vshrl.u32 %v2716, 7
        %v2718 = vsub.s32 5, %v2717
        %v2719 = vrot.slane %v318, %v2718
        %v2720 = vmul.f32 %v2700, %v2719
        %v2721 = vmul.f32 %v2701, %v2719
        %v2722 = vmul.f32 %v2702, %v2719
        %v2723 = vmul.f32 %v2703, %v2719
        %v2724 = vmul.f32 %v2704, %v2719
        %v2725 = vmul.f32 %v2705, %v2719
        %v2726 = vmul.f32 %v2706, %v2719
        %v2727 = vmul.f32 %v2707, %v2719
        %v2728 = vmul.f32 %v2708, %v2719
        %v2729 = vmul.f32 %v2709, %v2719
        %v2730 = vmul.f32 %v2710, %v2719
        %v2731 = vmul.f32 %v2711, %v2719
        %v2732 = vmul.f32 %v2712, %v2719
        %v2733 = vmul.f32 %v2713, %v2719
        %v2734 = vmul.f32 %v2714, %v2719
        %v2735 = vmul.f32 %v2715, %v2719
        %v2736 = vlaneseq
        %v2737 = vshrl.u32 %v2736, 7
        %v2738 = vsub.s32 6, %v2737
        %v2739 = vrot.slane %v318, %v2738
        %v2740 = vadd.f32 %v2720, %v2739
        %v2741 = vadd.f32 %v2721, %v2739
        %v2742 = vadd.f32 %v2722, %v2739
        %v2743 = vadd.f32 %v2723, %v2739
        %v2744 = vadd.f32 %v2724, %v2739
        %v2745 = vadd.f32 %v2725, %v2739
        %v2746 = vadd.f32 %v2726, %v2739
        %v2747 = vadd.f32 %v2727, %v2739
        %v2748 = vadd.f32 %v2728, %v2739
        %v2749 = vadd.f32 %v2729, %v2739
        %v2750 = vadd.f32 %v2730, %v2739
        %v2751 = vadd.f32 %v2731, %v2739
        %v2752 = vadd.f32 %v2732, %v2739
        %v2753 = vadd.f32 %v2733, %v2739
        %v2754 = vadd.f32 %v2734, %v2739
        %v2755 = vadd.f32 %v2735, %v2739
        %v2756 = vadd.f32 %v726, %v2740
        %v2757 = vadd.f32 %v727, %v2741
        %v2758 = vadd.f32 %v728, %v2742
        %v2759 = vadd.f32 %v729, %v2743
        %v2760 = vadd.f32 %v730, %v2744
        %v2761 = vadd.f32 %v731, %v2745
        %v2762 = vadd.f32 %v732, %v2746
        %v2763 = vadd.f32 %v733, %v2747
        %v2764 = vadd.f32 %v734, %v2748
        %v2765 = vadd.f32 %v735, %v2749
        %v2766 = vadd.f32 %v736, %v2750
        %v2767 = vadd.f32 %v737, %v2751
        %v2768 = vadd.f32 %v738, %v2752
        %v2769 = vadd.f32 %v739, %v2753
        %v2770 = vadd.f32 %v740, %v2754
        %v2771 = vadd.f32 %v741, %v2755
        %2772 = vst.msk [vmem:[%s206] sm:$0xff] %vm371, %v2756
        %2773 = vst.msk [vmem:[%s206 + $0x8] sm:$0xff] %vm371, %v2757
        %2774 = vst.msk [vmem:[%s206 + $0x10] sm:$0xff] %vm371, %v2758
        %2775 = vst.msk [vmem:[%s206 + $0x18] sm:$0xff] %vm371, %v2759
        %2776 = vst.msk [vmem:[%s206 + $0x20] sm:$0xff] %vm371, %v2760
        %2777 = vst.msk [vmem:[%s206 + $0x28] sm:$0xff] %vm371, %v2761
        %2778 = vst.msk [vmem:[%s206 + $0x30] sm:$0xff] %vm371, %v2762
        %2779 = vst.msk [vmem:[%s206 + $0x38] sm:$0xff] %vm371, %v2763
        %2780 = vst.msk [vmem:[%s206 + $0x40] sm:$0xff] %vm371, %v2764
        %2781 = vst.msk [vmem:[%s206 + $0x48] sm:$0xff] %vm371, %v2765
        %2782 = vst.msk [vmem:[%s206 + $0x50] sm:$0xff] %vm371, %v2766
        %2783 = vst.msk [vmem:[%s206 + $0x58] sm:$0xff] %vm371, %v2767
        %2784 = vst.msk [vmem:[%s206 + $0x60] sm:$0xff] %vm371, %v2768
        %2785 = vst.msk [vmem:[%s206 + $0x68] sm:$0xff] %vm371, %v2769
        %2786 = vst.msk [vmem:[%s206 + $0x70] sm:$0xff] %vm371, %v2770
        %2787 = vst.msk [vmem:[%s206 + $0x78] sm:$0xff] %vm371, %v2771
        %s2788 = sand.u32 %s115, 1
        %s2789 = scalar_lea.sflag [#allocation4], %s2788
        %s2790 = sand.u32 %s115, 1
        %s2791 = smul.addr %s2790, 128
        %s2792 = scalar_lea.vmem [#allocation3], %s2791
        // Predicated region
        $region37: #{tpu_custom_call.1} parent=31 // pred_check
          %p2793 = pneg %p125
        $region38: #{tpu_custom_call.1} parent=31 // pred_check_branch
          %2795 = sbr.rel (%p2793) target = $region40
        $region39: #{tpu_custom_call.1} parent=31 // pred_region
          %s2796 = smul.u32 2, %s21
          %s2798 = ssub.s32 2048, 2048
          %2799 = vsyncadd %s2789, %s2798
          %s2800 = smul.addr %s2796, 8
          %s2801 = smul.addr %s2800, 128
          %s2802 = scalar_lea.hbm %s3, %s2801
          %s2803 = sshll.u32 %s2792, 4
          %s2804 = int_to_ptr.vmem [resolvable:$true] %s2803
          %2809 = dma.vmem_to_hbm [thread:$0]  %s2804, 2048, %s2802, %s2789, 128, 128, 8
        $region40: #{tpu_custom_call.1} parent=31 // pred_fallthru
          _
      $region32: #{tpu_custom_call.1} parent=5 // pred_fallthru
        _
      %p2810 = scmp.le.s32.totalorder 2, %s12
      // Predicated region
      $region41: #{tpu_custom_call.1} parent=5 // pred_check
        %p2811 = pneg %p2810
      $region42: #{tpu_custom_call.1} parent=5 // pred_check_branch
        %2813 = sbr.rel (%p2811) target = $region44
      $region43: #{tpu_custom_call.1} parent=5 // pred_region
        %s2814 = ssub.s32 %s12, 2
        // Predicated region
        $region45: #{tpu_custom_call.1} parent=43 // pred_check
          %p2815 = pneg %p131
        $region46: #{tpu_custom_call.1} parent=43 // pred_check_branch
          %2817 = sbr.rel (%p2815) target = $region48
        $region47: #{tpu_custom_call.1} parent=43 // pred_region
          %s2818 = sand.u32 %s116, 1
          %s2819 = scalar_lea.sflag [#allocation4], %s2818
          %s2820 = sand.u32 %s116, 1
          %s2821 = smul.addr %s2820, 128
          %s2822 = scalar_lea.vmem [#allocation3], %s2821
          %2823 = dma.done %s2819, 2048
        $region48: #{tpu_custom_call.1} parent=43 // pred_fallthru
          _
      $region44: #{tpu_custom_call.1} parent=5 // pred_fallthru
        _
    $region6: #{tpu_custom_call.1} parent=1 // loop_footer
      %s16 = sadd.s32 1, %s12
    $region7: #{tpu_custom_call.1} parent=1 // loop_footer_branch
      %11 = sbr.rel target = $region3
    $region8: #{tpu_custom_call.1} parent=1 // loop_exit
      _
    %2824 = vsyncpa [#allocation4], 1
    %s2825 = scalar_lea.sflag [#allocation4], 1
    %2826 = vsyncpa %s2825, 1

</llo_original>
